<compile_context>
chip_gen: v7x
topology: tpu7x:2x2x1
jax: 0.10.0
libtpu: 0.0.40
codegen_flags: <defaults>
</compile_context>

<pallas_src>
import jax
import jax.numpy as jnp
from jax.experimental import pallas as pl
from jax.experimental.pallas import tpu as pltpu


# ----------------------------- kernel -----------------------------

def _make_kernel(dims1, dims2, output_size, n_points, tile_points, bias_offsets):
    """Fused: per-tile mlp1 chain + scratch-accumulated pools -> (last tile) mlp2 chain -> fc."""
    n1, n2 = len(dims1), len(dims2)
    n_w = n1 + 2 + (n2 - 1) + 1                 # mlp1 weights, (w_a, w_b), mlp2[1:], fc
    bins = n_points // output_size              # points per adaptive-pool bin
    bins_per_tile = tile_points // bins
    n_tiles = n_points // tile_points
    all_dims = list(dims1) + list(dims2) + [output_size]
    c2, c_last = dims1[1], dims1[-1]

    def kernel(*refs):
        x_ref = refs[0]
        w_refs = refs[1:1 + n_w]
        bias_ref = refs[1 + n_w]
        out_ref = refs[2 + n_w]
        pooled_sc = refs[3 + n_w]               # (c_last, 1) f32 running global max
        pre_sc = refs[4 + n_w]                  # (n_tiles, c2, bins_per_tile) f32 bin maxes

        t = pl.program_id(1)

        b_all = bias_ref[...]                   # (total_rows, 1) f32, 8-row aligned segments

        def bias(layer_idx):
            off = bias_offsets[layer_idx]
            return b_all[off:off + all_dims[layer_idx], :]

        @pl.when(t == 0)
        def _():                                # new batch: reset global-pool accumulator
            pooled_sc[...] = jnp.full((c_last, 1), -jnp.inf, dtype=jnp.float32)

        # ---- per-point MLP #1 on this points-tile (bf16 activations, f32 epilogue) ----
        h = x_ref[0, 0]                         # (c_pad, tile_points) bf16
        for i in range(n1):
            z = jnp.dot(w_refs[i][...], h, preferred_element_type=jnp.float32)
            h32 = jnp.maximum(z + bias(i), 0.0)
            if i == 1:
                # adaptive-pool bins covered by this tile: static lane-segment maxes
                # (C stays on sublanes -> no relayout); tap is dropped right after.
                segs = [jnp.max(h32[:, j * bins:(j + 1) * bins], axis=-1, keepdims=True)
                        for j in range(bins_per_tile)]
                pre_tile = segs[0] if bins_per_tile == 1 else jnp.concatenate(segs, axis=1)
                pre_sc[t] = pre_tile            # disjoint slot per tile -> plain store
            if i < n1 - 1:
                h = h32.astype(jnp.bfloat16)    # keep only the bf16 copy between layers
            else:
                # global max over this tile, running-max combine across tiles
                pooled_sc[...] = jnp.maximum(pooled_sc[...],
                                             jnp.max(h32, axis=-1, keepdims=True))

        # ---- last tile: mlp2 chain + fc on the tiny pooled features ----
        @pl.when(t == n_tiles - 1)
        def _():
            if n_tiles == 1:
                pre32 = pre_sc[0]
            else:
                pre32 = jnp.concatenate([pre_sc[k] for k in range(n_tiles)], axis=-1)
            pre = pre32.astype(jnp.bfloat16)                 # (c2, S)
            pooled = pooled_sc[...].astype(jnp.bfloat16)     # (c_last, 1)

            # mlp2 layer 0 with split weight (no concat); zb (M0,1) broadcasts over lanes.
            za = jnp.dot(w_refs[n1][...], pre, preferred_element_type=jnp.float32)
            zb = jnp.dot(w_refs[n1 + 1][...], pooled, preferred_element_type=jnp.float32)
            h2 = jnp.maximum(za + zb + bias(n1), 0.0).astype(jnp.bfloat16)

            for i in range(1, n2):
                z = jnp.dot(w_refs[n1 + 1 + i][...], h2, preferred_element_type=jnp.float32)
                h2 = jnp.maximum(z + bias(n1 + i), 0.0).astype(jnp.bfloat16)

            y = jnp.dot(w_refs[n_w - 1][...], h2,
                        preferred_element_type=jnp.float32) + bias(n1 + n2)
            out_ref[0] = y.astype(out_ref.dtype)             # (S, S) for this batch

    return kernel


# ----------------------------- wrapper -----------------------------

def feature_pointnet_pallas(x, mlp1_params, mlp2_params, fc_params, *,
                            output_size, tile_points=None):
    """x: (B, C_in, N) f32. params: lists of (w, b) with BN folded. Returns (B, output_size, output_size)."""
    B, C_in, N = x.shape
    dims1 = [w.shape[0] for w, _ in mlp1_params]
    dims2 = [w.shape[0] for w, _ in mlp2_params]
    assert len(dims1) >= 2, "FeaturePointNet taps the output of mlp1 layer index 1"
    assert output_size > 0
    assert N % output_size == 0, "in-kernel adaptive pool requires N % output_size == 0"
    bins = N // output_size
    S = output_size

    if tile_points is None:
        # Heuristic: ~1024 points/tile keeps live bf16 activations well inside v7x's 64 MiB VMEM
        # even at C=1024; v5e/v6e (128 MiB) could take 2x but this is safe everywhere.
        tile_points = N
        target = 1024
        while tile_points > target and tile_points % 2 == 0 and (tile_points // 2) % bins == 0:
            tile_points //= 2
    assert N % tile_points == 0 and tile_points % bins == 0, \
        "tile_points must divide N and be a multiple of N // output_size"
    n_tiles = N // tile_points
    bins_per_tile = tile_points // bins

    c_pad = -(-C_in // 16) * 16                 # bf16 packs 2 rows/sublane -> pad K to 16
    c2, c_last = dims1[1], dims1[-1]

    # ---- activations: (B, C, N) -> (B, n_tiles, c_pad, tile_points), bf16 ----
    xp = x if c_pad == C_in else jnp.pad(x, ((0, 0), (0, c_pad - C_in), (0, 0)))
    x4d = jnp.transpose(xp.reshape(B, c_pad, n_tiles, tile_points),
                        (0, 2, 1, 3)).astype(jnp.bfloat16)

    # ---- weights (bf16), first-layer K padded, mlp2 layer-0 split into (pre | pooled) ----
    weights = []
    w1 = mlp1_params[0][0]
    if c_pad != C_in:
        w1 = jnp.pad(w1, ((0, 0), (0, c_pad - C_in)))
    weights.append(w1.astype(jnp.bfloat16))
    for w, _ in mlp1_params[1:]:
        weights.append(w.astype(jnp.bfloat16))
    w20 = mlp2_params[0][0]
    weights.append(w20[:, :c2].astype(jnp.bfloat16))    # w_a : pre-pooled columns
    weights.append(w20[:, c2:].astype(jnp.bfloat16))    # w_b : global-pooled columns
    for w, _ in mlp2_params[1:]:
        weights.append(w.astype(jnp.bfloat16))
    weights.append(fc_params[0].astype(jnp.bfloat16))

    # ---- all biases packed into one (total, 1) f32 array, 8-row aligned segments ----
    biases = [b for _, b in mlp1_params] + [b for _, b in mlp2_params] + [fc_params[1]]
    rows, offsets, off = [], [], 0
    for b in biases:
        c = b.shape[0]
        cp = -(-c // 8) * 8
        offsets.append(off)
        rows.append(jnp.pad(b.reshape(c, 1).astype(jnp.float32), ((0, cp - c), (0, 0))))
        off += cp
    bias_pack = jnp.concatenate(rows, axis=0)

    kernel = _make_kernel(dims1, dims2, S, N, tile_points, offsets)

    x_spec = pl.BlockSpec((1, 1, c_pad, tile_points), lambda i, t: (i, t, 0, 0))
    out_spec = pl.BlockSpec((1, S, S), lambda i, t: (i, 0, 0))
    out_shape = jax.ShapeDtypeStruct((B, S, S), jnp.float32)
    scratch = [pltpu.VMEM((c_last, 1), jnp.float32),
               pltpu.VMEM((n_tiles, c2, bins_per_tile), jnp.float32)]

    def run(single_buffer_invariants):
        def inv_spec(shape):
            if single_buffer_invariants:
                # grid-invariant operands: no need for double-buffering VMEM
                return pl.BlockSpec(shape, lambda i, t: (0, 0), pipeline_mode=pl.Buffered(1))
            return pl.BlockSpec(shape, lambda i, t: (0, 0))

        in_specs = ([x_spec]
                    + [inv_spec(w.shape) for w in weights]
                    + [inv_spec(bias_pack.shape)])
        return pl.pallas_call(
            kernel,
            out_shape=out_shape,
            grid_spec=pltpu.PrefetchScalarGridSpec(
                num_scalar_prefetch=0,
                grid=(B, n_tiles),
                in_specs=in_specs,
                out_specs=out_spec,
                scratch_shapes=scratch,
            ),
            compiler_params=pltpu.CompilerParams(
                dimension_semantics=("parallel", "arbitrary"),
                vmem_limit_bytes=48 * 1024 * 1024,
            ),
        )(x4d, *weights, bias_pack)

    try:
        return run(True)
    except Exception:
        # pl.Buffered / pipeline_mode not supported by this jax version -> default buffering.
        return run(False)


# ----------------------------- parameter construction (glue) -----------------------------

def _fold_conv_bn(key, c_in, c_out, eps=1e-5):
    """Deterministic Conv1d(k=1)+BatchNorm1d(eval) params, folded into (w_eff, b_eff)."""
    k = jax.random.split(key, 6)
    w = jax.random.normal(k[0], (c_out, c_in), jnp.float32) * 0.1
    b = jax.random.normal(k[1], (c_out,), jnp.float32) * 0.1
    gamma = 0.5 + jax.random.uniform(k[2], (c_out,), jnp.float32)
    beta = jax.random.normal(k[3], (c_out,), jnp.float32) * 0.1
    mean = jax.random.normal(k[4], (c_out,), jnp.float32) * 0.1
    var = 0.5 + jax.random.uniform(k[5], (c_out,), jnp.float32)
    scale = gamma / jnp.sqrt(var + eps)
    w_eff = w * scale[:, None]
    b_eff = (b - mean) * scale + beta
    return w_eff, b_eff.reshape(c_out, 1)


def make_params(key, input_channel, per_point_mlp1, per_point_mlp2, output_size):
    mlp1, mlp2 = [], []
    c = input_channel
    for c_out in per_point_mlp1:
        key, sub = jax.random.split(key)
        mlp1.append(_fold_conv_bn(sub, c, c_out))
        c = c_out
    c = c + per_point_mlp1[1]
    for c_out in per_point_mlp2:
        key, sub = jax.random.split(key)
        mlp2.append(_fold_conv_bn(sub, c, c_out))
        c = c_out
    key, k1, k2 = jax.random.split(key, 3)
    w_fc = jax.random.normal(k1, (output_size, c), jnp.float32) * 0.1
    b_fc = (jax.random.normal(k2, (output_size,), jnp.float32) * 0.1).reshape(output_size, 1)
    return mlp1, mlp2, (w_fc, b_fc)


# ----------------------------- pure-JAX reference -----------------------------

def reference_forward(x, mlp1, mlp2, fc, output_size):
    """Matches the kernel's numerics: bf16 matmul inputs, f32 accumulation, f32 elementwise."""
    def mm(w, h):
        return jnp.einsum('oc,bcn->bon', w.astype(jnp.bfloat16), h.astype(jnp.bfloat16),
                          preferred_element_type=jnp.float32)

    B, _, N = x.shape
    h = x
    second = None
    for i, (w, b) in enumerate(mlp1):
        h = jnp.maximum(mm(w, h) + b[None], 0.0)
        if i == 1:
            second = h
    pooled = jnp.max(h, axis=2, keepdims=True)
    cols = []
    for j in range(output_size):
        s = (j * N) // output_size
        e = -((-(j + 1) * N) // output_size)
        cols.append(jnp.max(second[:, :, s:e], axis=2, keepdims=True))
    pre = jnp.concatenate(cols, axis=2)
    h2 = jnp.concatenate(
        [pre, jnp.broadcast_to(pooled, (B, pooled.shape[1], output_size))], axis=1)
    for w, b in mlp2:
        h2 = jnp.maximum(mm(w, h2) + b[None], 0.0)
    w, b = fc
    return mm(w, h2) + b[None]


# ----------------------------- main -----------------------------

if __name__ == "__main__":
    B, input_channel, N = 2, 4, 16
    per_point_mlp1 = [16, 32, 64]
    per_point_mlp2 = [32, 16]
    output_size = 8

    key = jax.random.PRNGKey(0)
    key, kx = jax.random.split(key)
    x = jax.random.normal(kx, (B, input_channel, N), jnp.float32)

    mlp1, mlp2, fc = make_params(key, input_channel, per_point_mlp1, per_point_mlp2, output_size)

    ref = jax.block_until_ready(reference_forward(x, mlp1, mlp2, fc, output_size))

    # multi-tile path: exercises the scratch-accumulated pools (2 point tiles per batch)
    out_tiled = jax.block_until_ready(
        feature_pointnet_pallas(x, mlp1, mlp2, fc, output_size=output_size, tile_points=8))
    # default (single-tile) path
    out_full = jax.block_until_ready(
        feature_pointnet_pallas(x, mlp1, mlp2, fc, output_size=output_size))

    assert out_tiled.shape == (B, output_size, output_size), out_tiled.shape
    assert out_full.shape == (B, output_size, output_size), out_full.shape
    err_t = float(jnp.max(jnp.abs(out_tiled - ref)))
    err_f = float(jnp.max(jnp.abs(out_full - ref)))
    assert jnp.allclose(out_tiled, ref, atol=1e-2, rtol=1e-2), err_t
    assert jnp.allclose(out_full, ref, atol=1e-2, rtol=1e-2), err_f
    print("KERNEL_OK")
</pallas_src>

<mosaic_0001>
module attributes {stable_mosaic.version = 11 : i64} {
  func.func @kernel(%arg0: i32, %arg1: i32, %arg2: memref<1x1x16x8xbf16, #tpu.memory_space<vmem>>, %arg3: memref<16x16xbf16, #tpu.memory_space<vmem>>, %arg4: memref<32x16xbf16, #tpu.memory_space<vmem>>, %arg5: memref<64x32xbf16, #tpu.memory_space<vmem>>, %arg6: memref<32x32xbf16, #tpu.memory_space<vmem>>, %arg7: memref<32x64xbf16, #tpu.memory_space<vmem>>, %arg8: memref<16x32xbf16, #tpu.memory_space<vmem>>, %arg9: memref<8x16xbf16, #tpu.memory_space<vmem>>, %arg10: memref<168x1xf32, #tpu.memory_space<vmem>>, %arg11: memref<1x8x8xf32, #tpu.memory_space<vmem>>, %arg12: memref<64x1xf32, #tpu.memory_space<vmem>>, %arg13: memref<2x32x4xf32, #tpu.memory_space<vmem>>) attributes {dimension_semantics = [#tpu.dimension_semantics<parallel>, #tpu.dimension_semantics<arbitrary>], iteration_bounds = array<i64: 2, 2>, scalar_prefetch = 0 : i64, scratch_operands = 2 : i64, tpu.core_type = #tpu.core_type<tc>, window_params = [{transform_indices = @transform_0, window_bounds = array<i64: 1, 1, 16, 8>}, {pipeline_mode = #tpu.pipeline_mode<synchronous>, transform_indices = @transform_1, window_bounds = array<i64: 16, 16>}, {pipeline_mode = #tpu.pipeline_mode<synchronous>, transform_indices = @transform_2, window_bounds = array<i64: 32, 16>}, {pipeline_mode = #tpu.pipeline_mode<synchronous>, transform_indices = @transform_3, window_bounds = array<i64: 64, 32>}, {pipeline_mode = #tpu.pipeline_mode<synchronous>, transform_indices = @transform_4, window_bounds = array<i64: 32, 32>}, {pipeline_mode = #tpu.pipeline_mode<synchronous>, transform_indices = @transform_5, window_bounds = array<i64: 32, 64>}, {pipeline_mode = #tpu.pipeline_mode<synchronous>, transform_indices = @transform_6, window_bounds = array<i64: 16, 32>}, {pipeline_mode = #tpu.pipeline_mode<synchronous>, transform_indices = @transform_7, window_bounds = array<i64: 8, 16>}, {pipeline_mode = #tpu.pipeline_mode<synchronous>, transform_indices = @transform_8, window_bounds = array<i64: 168, 1>}, {transform_indices = @transform_9, window_bounds = array<i64: 1, 8, 8>}]} {
    %c0 = arith.constant 0 : index
    %c0_0 = arith.constant 0 : index
    %0 = vector.load %arg10[%c0, %c0_0] : memref<168x1xf32, #tpu.memory_space<vmem>>, vector<168x1xf32>
    %c0_i32 = arith.constant 0 : i32
    %1 = arith.cmpi eq, %arg1, %c0_i32 : i32
    %2 = arith.extui %1 : i1 to i32
    %c0_i32_1 = arith.constant 0 : i32
    %3 = arith.cmpi ne, %2, %c0_i32_1 : i32
    scf.if %3 {
      %cst_29 = arith.constant 0xFF800000 : f32
      %54 = vector.broadcast %cst_29 : f32 to vector<64x1xf32>
      %c0_30 = arith.constant 0 : index
      %c0_31 = arith.constant 0 : index
      %55 = vector.load %arg12[%c0_30, %c0_31] : memref<64x1xf32, #tpu.memory_space<vmem>>, vector<64x1xf32>
      tpu.vector_store %arg12[%c0_30, %c0_31], %54 {strides = array<i32>} : memref<64x1xf32, #tpu.memory_space<vmem>>, vector<64x1xf32>,
    } else {
    }
    %c0_2 = arith.constant 0 : index
    %c0_3 = arith.constant 0 : index
    %c0_4 = arith.constant 0 : index
    %c0_5 = arith.constant 0 : index
    %4 = vector.load %arg2[%c0_2, %c0_3, %c0_4, %c0_5] : memref<1x1x16x8xbf16, #tpu.memory_space<vmem>>, vector<1x1x16x8xbf16>
    %5 = vector.shape_cast %4 : vector<1x1x16x8xbf16> to vector<16x8xbf16>
    %c0_6 = arith.constant 0 : index
    %c0_7 = arith.constant 0 : index
    %6 = vector.load %arg3[%c0_6, %c0_7] : memref<16x16xbf16, #tpu.memory_space<vmem>>, vector<16x16xbf16>
    %cst = arith.constant dense<0.000000e+00> : vector<16x8xf32>
    %7 = tpu.matmul %6, %5, %cst {dimension_numbers = #tpu.dot_dimension_numbers<[1], [0], [0], [1], [0, 0, 1, 1], [], []>} : vector<16x16xbf16>, vector<16x8xbf16>, vector<16x8xf32> -> vector<16x8xf32>
    %8 = vector.extract_strided_slice %0 {offsets = [0, 0], sizes = [16, 1], strides = [1, 1]} : vector<168x1xf32> to vector<16x1xf32>
    %9 = vector.broadcast %8 : vector<16x1xf32> to vector<16x8xf32>
    %10 = arith.addf %7, %9 : vector<16x8xf32>
    %cst_8 = arith.constant 0.000000e+00 : f32
    %11 = vector.broadcast %cst_8 : f32 to vector<16x8xf32>
    %12 = arith.maximumf %10, %11 : vector<16x8xf32>
    %13 = arith.truncf %12 : vector<16x8xf32> to vector<16x8xbf16>
    %c0_9 = arith.constant 0 : index
    %c0_10 = arith.constant 0 : index
    %14 = vector.load %arg4[%c0_9, %c0_10] : memref<32x16xbf16, #tpu.memory_space<vmem>>, vector<32x16xbf16>
    %cst_11 = arith.constant dense<0.000000e+00> : vector<32x8xf32>
    %15 = tpu.matmul %14, %13, %cst_11 {dimension_numbers = #tpu.dot_dimension_numbers<[1], [0], [0], [1], [0, 0, 1, 1], [], []>} : vector<32x16xbf16>, vector<16x8xbf16>, vector<32x8xf32> -> vector<32x8xf32>
    %16 = vector.extract_strided_slice %0 {offsets = [16, 0], sizes = [32, 1], strides = [1, 1]} : vector<168x1xf32> to vector<32x1xf32>
    %17 = vector.broadcast %16 : vector<32x1xf32> to vector<32x8xf32>
    %18 = arith.addf %15, %17 : vector<32x8xf32>
    %cst_12 = arith.constant 0.000000e+00 : f32
    %19 = vector.broadcast %cst_12 : f32 to vector<32x8xf32>
    %20 = arith.maximumf %18, %19 : vector<32x8xf32>
    %21 = vector.extract_strided_slice %20 {offsets = [0, 0], sizes = [32, 2], strides = [1, 1]} : vector<32x8xf32> to vector<32x2xf32>
    %cst_13 = arith.constant dense<0xFF800000> : vector<32xf32>
    %22 = vector.multi_reduction <maximumf>, %21, %cst_13 [1] : vector<32x2xf32> to vector<32xf32>
    %23 = vector.shape_cast %22 : vector<32xf32> to vector<32x1xf32>
    %24 = vector.extract_strided_slice %20 {offsets = [0, 2], sizes = [32, 2], strides = [1, 1]} : vector<32x8xf32> to vector<32x2xf32>
    %cst_14 = arith.constant dense<0xFF800000> : vector<32xf32>
    %25 = vector.multi_reduction <maximumf>, %24, %cst_14 [1] : vector<32x2xf32> to vector<32xf32>
    %26 = vector.shape_cast %25 : vector<32xf32> to vector<32x1xf32>
    %27 = vector.extract_strided_slice %20 {offsets = [0, 4], sizes = [32, 2], strides = [1, 1]} : vector<32x8xf32> to vector<32x2xf32>
    %cst_15 = arith.constant dense<0xFF800000> : vector<32xf32>
    %28 = vector.multi_reduction <maximumf>, %27, %cst_15 [1] : vector<32x2xf32> to vector<32xf32>
    %29 = vector.shape_cast %28 : vector<32xf32> to vector<32x1xf32>
    %30 = vector.extract_strided_slice %20 {offsets = [0, 6], sizes = [32, 2], strides = [1, 1]} : vector<32x8xf32> to vector<32x2xf32>
    %cst_16 = arith.constant dense<0xFF800000> : vector<32xf32>
    %31 = vector.multi_reduction <maximumf>, %30, %cst_16 [1] : vector<32x2xf32> to vector<32xf32>
    %32 = vector.shape_cast %31 : vector<32xf32> to vector<32x1xf32>
    %33 = tpu.concatenate %23, %26, %29, %32 in 1 : vector<32x1xf32>, vector<32x1xf32>, vector<32x1xf32>, vector<32x1xf32> -> vector<32x4xf32>
    %34 = arith.index_cast %arg1 : i32 to index
    %c0_17 = arith.constant 0 : index
    %c0_18 = arith.constant 0 : index
    %35 = vector.load %arg13[%34, %c0_17, %c0_18] : memref<2x32x4xf32, #tpu.memory_space<vmem>>, vector<1x32x4xf32>
    %36 = vector.shape_cast %35 : vector<1x32x4xf32> to vector<32x4xf32>
    %37 = vector.shape_cast %33 : vector<32x4xf32> to vector<1x32x4xf32>
    tpu.vector_store %arg13[%34, %c0_17, %c0_18], %37 {strides = array<i32>} : memref<2x32x4xf32, #tpu.memory_space<vmem>>, vector<1x32x4xf32>,
    %38 = arith.truncf %20 : vector<32x8xf32> to vector<32x8xbf16>
    %c0_19 = arith.constant 0 : index
    %c0_20 = arith.constant 0 : index
    %39 = vector.load %arg5[%c0_19, %c0_20] : memref<64x32xbf16, #tpu.memory_space<vmem>>, vector<64x32xbf16>
    %cst_21 = arith.constant dense<0.000000e+00> : vector<64x8xf32>
    %40 = tpu.matmul %39, %38, %cst_21 {dimension_numbers = #tpu.dot_dimension_numbers<[1], [0], [0], [1], [0, 0, 1, 1], [], []>} : vector<64x32xbf16>, vector<32x8xbf16>, vector<64x8xf32> -> vector<64x8xf32>
    %41 = vector.extract_strided_slice %0 {offsets = [48, 0], sizes = [64, 1], strides = [1, 1]} : vector<168x1xf32> to vector<64x1xf32>
    %42 = vector.broadcast %41 : vector<64x1xf32> to vector<64x8xf32>
    %43 = arith.addf %40, %42 : vector<64x8xf32>
    %cst_22 = arith.constant 0.000000e+00 : f32
    %44 = vector.broadcast %cst_22 : f32 to vector<64x8xf32>
    %45 = arith.maximumf %43, %44 : vector<64x8xf32>
    %c0_23 = arith.constant 0 : index
    %c0_24 = arith.constant 0 : index
    %46 = vector.load %arg12[%c0_23, %c0_24] : memref<64x1xf32, #tpu.memory_space<vmem>>, vector<64x1xf32>
    %cst_25 = arith.constant dense<0xFF800000> : vector<64xf32>
    %47 = vector.multi_reduction <maximumf>, %45, %cst_25 [1] : vector<64x8xf32> to vector<64xf32>
    %48 = vector.shape_cast %47 : vector<64xf32> to vector<64x1xf32>
    %49 = arith.maximumf %46, %48 : vector<64x1xf32>
    %c0_26 = arith.constant 0 : index
    %c0_27 = arith.constant 0 : index
    %50 = vector.load %arg12[%c0_26, %c0_27] : memref<64x1xf32, #tpu.memory_space<vmem>>, vector<64x1xf32>
    tpu.vector_store %arg12[%c0_26, %c0_27], %49 {strides = array<i32>} : memref<64x1xf32, #tpu.memory_space<vmem>>, vector<64x1xf32>,
    %c1_i32 = arith.constant 1 : i32
    %51 = arith.cmpi eq, %arg1, %c1_i32 : i32
    %52 = arith.extui %51 : i1 to i32
    %c0_i32_28 = arith.constant 0 : i32
    %53 = arith.cmpi ne, %52, %c0_i32_28 : i32
    scf.if %53 {
      %c0_29 = arith.constant 0 : index
      %c0_30 = arith.constant 0 : index
      %c0_31 = arith.constant 0 : index
      %54 = vector.load %arg13[%c0_29, %c0_30, %c0_31] : memref<2x32x4xf32, #tpu.memory_space<vmem>>, vector<1x32x4xf32>
      %55 = vector.shape_cast %54 : vector<1x32x4xf32> to vector<32x4xf32>
      %c1 = arith.constant 1 : index
      %c0_32 = arith.constant 0 : index
      %c0_33 = arith.constant 0 : index
      %56 = vector.load %arg13[%c1, %c0_32, %c0_33] : memref<2x32x4xf32, #tpu.memory_space<vmem>>, vector<1x32x4xf32>
      %57 = vector.shape_cast %56 : vector<1x32x4xf32> to vector<32x4xf32>
      %58 = tpu.concatenate %55, %57 in 1 : vector<32x4xf32>, vector<32x4xf32> -> vector<32x8xf32>
      %59 = arith.truncf %58 : vector<32x8xf32> to vector<32x8xbf16>
      %c0_34 = arith.constant 0 : index
      %c0_35 = arith.constant 0 : index
      %60 = vector.load %arg12[%c0_34, %c0_35] : memref<64x1xf32, #tpu.memory_space<vmem>>, vector<64x1xf32>
      %61 = arith.truncf %60 : vector<64x1xf32> to vector<64x1xbf16>
      %c0_36 = arith.constant 0 : index
      %c0_37 = arith.constant 0 : index
      %62 = vector.load %arg6[%c0_36, %c0_37] : memref<32x32xbf16, #tpu.memory_space<vmem>>, vector<32x32xbf16>
      %cst_38 = arith.constant dense<0.000000e+00> : vector<32x8xf32>
      %63 = tpu.matmul %62, %59, %cst_38 {dimension_numbers = #tpu.dot_dimension_numbers<[1], [0], [0], [1], [0, 0, 1, 1], [], []>} : vector<32x32xbf16>, vector<32x8xbf16>, vector<32x8xf32> -> vector<32x8xf32>
      %c0_39 = arith.constant 0 : index
      %c0_40 = arith.constant 0 : index
      %64 = vector.load %arg7[%c0_39, %c0_40] : memref<32x64xbf16, #tpu.memory_space<vmem>>, vector<32x64xbf16>
      %cst_41 = arith.constant dense<0.000000e+00> : vector<32x1xf32>
      %65 = tpu.matmul %64, %61, %cst_41 {dimension_numbers = #tpu.dot_dimension_numbers<[1], [0], [0], [1], [0, 0, 1, 1], [], []>} : vector<32x64xbf16>, vector<64x1xbf16>, vector<32x1xf32> -> vector<32x1xf32>
      %66 = vector.broadcast %65 : vector<32x1xf32> to vector<32x8xf32>
      %67 = arith.addf %63, %66 : vector<32x8xf32>
      %68 = vector.extract_strided_slice %0 {offsets = [112, 0], sizes = [32, 1], strides = [1, 1]} : vector<168x1xf32> to vector<32x1xf32>
      %69 = vector.broadcast %68 : vector<32x1xf32> to vector<32x8xf32>
      %70 = arith.addf %67, %69 : vector<32x8xf32>
      %cst_42 = arith.constant 0.000000e+00 : f32
      %71 = vector.broadcast %cst_42 : f32 to vector<32x8xf32>
      %72 = arith.maximumf %70, %71 : vector<32x8xf32>
      %73 = arith.truncf %72 : vector<32x8xf32> to vector<32x8xbf16>
      %c0_43 = arith.constant 0 : index
      %c0_44 = arith.constant 0 : index
      %74 = vector.load %arg8[%c0_43, %c0_44] : memref<16x32xbf16, #tpu.memory_space<vmem>>, vector<16x32xbf16>
      %cst_45 = arith.constant dense<0.000000e+00> : vector<16x8xf32>
      %75 = tpu.matmul %74, %73, %cst_45 {dimension_numbers = #tpu.dot_dimension_numbers<[1], [0], [0], [1], [0, 0, 1, 1], [], []>} : vector<16x32xbf16>, vector<32x8xbf16>, vector<16x8xf32> -> vector<16x8xf32>
      %76 = vector.extract_strided_slice %0 {offsets = [144, 0], sizes = [16, 1], strides = [1, 1]} : vector<168x1xf32> to vector<16x1xf32>
      %77 = vector.broadcast %76 : vector<16x1xf32> to vector<16x8xf32>
      %78 = arith.addf %75, %77 : vector<16x8xf32>
      %cst_46 = arith.constant 0.000000e+00 : f32
      %79 = vector.broadcast %cst_46 : f32 to vector<16x8xf32>
      %80 = arith.maximumf %78, %79 : vector<16x8xf32>
      %81 = arith.truncf %80 : vector<16x8xf32> to vector<16x8xbf16>
      %c0_47 = arith.constant 0 : index
      %c0_48 = arith.constant 0 : index
      %82 = vector.load %arg9[%c0_47, %c0_48] : memref<8x16xbf16, #tpu.memory_space<vmem>>, vector<8x16xbf16>
      %cst_49 = arith.constant dense<0.000000e+00> : vector<8x8xf32>
      %83 = tpu.matmul %82, %81, %cst_49 {dimension_numbers = #tpu.dot_dimension_numbers<[1], [0], [0], [1], [0, 0, 1, 1], [], []>} : vector<8x16xbf16>, vector<16x8xbf16>, vector<8x8xf32> -> vector<8x8xf32>
      %84 = vector.extract_strided_slice %0 {offsets = [160, 0], sizes = [8, 1], strides = [1, 1]} : vector<168x1xf32> to vector<8x1xf32>
      %85 = vector.broadcast %84 : vector<8x1xf32> to vector<8x8xf32>
      %86 = arith.addf %83, %85 : vector<8x8xf32>
      %c0_50 = arith.constant 0 : index
      %c0_51 = arith.constant 0 : index
      %c0_52 = arith.constant 0 : index
      %87 = vector.load %arg11[%c0_50, %c0_51, %c0_52] : memref<1x8x8xf32, #tpu.memory_space<vmem>>, vector<1x8x8xf32>
      %88 = vector.shape_cast %87 : vector<1x8x8xf32> to vector<8x8xf32>
      %89 = vector.shape_cast %86 : vector<8x8xf32> to vector<1x8x8xf32>
      tpu.vector_store %arg11[%c0_50, %c0_51, %c0_52], %89 {strides = array<i32>} : memref<1x8x8xf32, #tpu.memory_space<vmem>>, vector<1x8x8xf32>,
    } else {
    }
    return
  }
  func.func @transform_0(%arg0: i32, %arg1: i32) -> (i32, i32, i32, i32) {
    %c0_i32 = arith.constant 0 : i32
    %c0_i32_0 = arith.constant 0 : i32
    %c0_i32_1 = arith.constant 0 : i32
    return %arg0, %arg1, %c0_i32, %c0_i32_0 : i32, i32, i32, i32
  }
  func.func @transform_1(%arg0: i32, %arg1: i32) -> (i32, i32) {
    %c0_i32 = arith.constant 0 : i32
    %c0_i32_0 = arith.constant 0 : i32
    %c0_i32_1 = arith.constant 0 : i32
    return %c0_i32, %c0_i32_0 : i32, i32
  }
  func.func @transform_2(%arg0: i32, %arg1: i32) -> (i32, i32) {
    %c0_i32 = arith.constant 0 : i32
    %c0_i32_0 = arith.constant 0 : i32
    %c0_i32_1 = arith.constant 0 : i32
    return %c0_i32, %c0_i32_0 : i32, i32
  }
  func.func @transform_3(%arg0: i32, %arg1: i32) -> (i32, i32) {
    %c0_i32 = arith.constant 0 : i32
    %c0_i32_0 = arith.constant 0 : i32
    %c0_i32_1 = arith.constant 0 : i32
    return %c0_i32, %c0_i32_0 : i32, i32
  }
  func.func @transform_4(%arg0: i32, %arg1: i32) -> (i32, i32) {
    %c0_i32 = arith.constant 0 : i32
    %c0_i32_0 = arith.constant 0 : i32
    %c0_i32_1 = arith.constant 0 : i32
    return %c0_i32, %c0_i32_0 : i32, i32
  }
  func.func @transform_5(%arg0: i32, %arg1: i32) -> (i32, i32) {
    %c0_i32 = arith.constant 0 : i32
    %c0_i32_0 = arith.constant 0 : i32
    %c0_i32_1 = arith.constant 0 : i32
    return %c0_i32, %c0_i32_0 : i32, i32
  }
  func.func @transform_6(%arg0: i32, %arg1: i32) -> (i32, i32) {
    %c0_i32 = arith.constant 0 : i32
    %c0_i32_0 = arith.constant 0 : i32
    %c0_i32_1 = arith.constant 0 : i32
    return %c0_i32, %c0_i32_0 : i32, i32
  }
  func.func @transform_7(%arg0: i32, %arg1: i32) -> (i32, i32) {
    %c0_i32 = arith.constant 0 : i32
    %c0_i32_0 = arith.constant 0 : i32
    %c0_i32_1 = arith.constant 0 : i32
    return %c0_i32, %c0_i32_0 : i32, i32
  }
  func.func @transform_8(%arg0: i32, %arg1: i32) -> (i32, i32) {
    %c0_i32 = arith.constant 0 : i32
    %c0_i32_0 = arith.constant 0 : i32
    %c0_i32_1 = arith.constant 0 : i32
    return %c0_i32, %c0_i32_0 : i32, i32
  }
  func.func @transform_9(%arg0: i32, %arg1: i32) -> (i32, i32, i32) {
    %c0_i32 = arith.constant 0 : i32
    %c0_i32_0 = arith.constant 0 : i32
    %c0_i32_1 = arith.constant 0 : i32
    return %arg0, %c0_i32, %c0_i32_0 : i32, i32, i32
  }
}

module attributes {stable_mosaic.version = 11 : i64} {
  func.func @kernel(%arg0: i32, %arg1: i32, %arg2: memref<1x1x16x8xbf16, #tpu.memory_space<vmem>>, %arg3: memref<16x16xbf16, #tpu.memory_space<vmem>>, %arg4: memref<32x16xbf16, #tpu.memory_space<vmem>>, %arg5: memref<64x32xbf16, #tpu.memory_space<vmem>>, %arg6: memref<32x32xbf16, #tpu.memory_space<vmem>>, %arg7: memref<32x64xbf16, #tpu.memory_space<vmem>>, %arg8: memref<16x32xbf16, #tpu.memory_space<vmem>>, %arg9: memref<8x16xbf16, #tpu.memory_space<vmem>>, %arg10: memref<168x1xf32, #tpu.memory_space<vmem>>, %arg11: memref<1x8x8xf32, #tpu.memory_space<vmem>>, %arg12: memref<64x1xf32, #tpu.memory_space<vmem>>, %arg13: memref<2x32x4xf32, #tpu.memory_space<vmem>>) attributes {dimension_semantics = [#tpu.dimension_semantics<parallel>, #tpu.dimension_semantics<arbitrary>], iteration_bounds = array<i64: 2, 2>, scalar_prefetch = 0 : i64, scratch_operands = 2 : i64, tpu.core_type = #tpu.core_type<tc>, window_params = [{transform_indices = @transform_0, window_bounds = array<i64: 1, 1, 16, 8>}, {pipeline_mode = #tpu.pipeline_mode<synchronous>, transform_indices = @transform_1, window_bounds = array<i64: 16, 16>}, {pipeline_mode = #tpu.pipeline_mode<synchronous>, transform_indices = @transform_2, window_bounds = array<i64: 32, 16>}, {pipeline_mode = #tpu.pipeline_mode<synchronous>, transform_indices = @transform_3, window_bounds = array<i64: 64, 32>}, {pipeline_mode = #tpu.pipeline_mode<synchronous>, transform_indices = @transform_4, window_bounds = array<i64: 32, 32>}, {pipeline_mode = #tpu.pipeline_mode<synchronous>, transform_indices = @transform_5, window_bounds = array<i64: 32, 64>}, {pipeline_mode = #tpu.pipeline_mode<synchronous>, transform_indices = @transform_6, window_bounds = array<i64: 16, 32>}, {pipeline_mode = #tpu.pipeline_mode<synchronous>, transform_indices = @transform_7, window_bounds = array<i64: 8, 16>}, {pipeline_mode = #tpu.pipeline_mode<synchronous>, transform_indices = @transform_8, window_bounds = array<i64: 168, 1>}, {transform_indices = @transform_9, window_bounds = array<i64: 1, 8, 8>}]} {
    %c0 = arith.constant 0 : index
    %c0_0 = arith.constant 0 : index
    %0 = vector.load %arg10[%c0, %c0_0] : memref<168x1xf32, #tpu.memory_space<vmem>>, vector<168x1xf32>
    %c0_i32 = arith.constant 0 : i32
    %1 = arith.cmpi eq, %arg1, %c0_i32 : i32
    %2 = arith.extui %1 : i1 to i32
    %c0_i32_1 = arith.constant 0 : i32
    %3 = arith.cmpi ne, %2, %c0_i32_1 : i32
    scf.if %3 {
      %cst_29 = arith.constant 0xFF800000 : f32
      %54 = vector.broadcast %cst_29 : f32 to vector<64x1xf32>
      %c0_30 = arith.constant 0 : index
      %c0_31 = arith.constant 0 : index
      %55 = vector.load %arg12[%c0_30, %c0_31] : memref<64x1xf32, #tpu.memory_space<vmem>>, vector<64x1xf32>
      tpu.vector_store %arg12[%c0_30, %c0_31], %54 {strides = array<i32>} : memref<64x1xf32, #tpu.memory_space<vmem>>, vector<64x1xf32>,
    } else {
    }
    %c0_2 = arith.constant 0 : index
    %c0_3 = arith.constant 0 : index
    %c0_4 = arith.constant 0 : index
    %c0_5 = arith.constant 0 : index
    %4 = vector.load %arg2[%c0_2, %c0_3, %c0_4, %c0_5] : memref<1x1x16x8xbf16, #tpu.memory_space<vmem>>, vector<1x1x16x8xbf16>
    %5 = vector.shape_cast %4 : vector<1x1x16x8xbf16> to vector<16x8xbf16>
    %c0_6 = arith.constant 0 : index
    %c0_7 = arith.constant 0 : index
    %6 = vector.load %arg3[%c0_6, %c0_7] : memref<16x16xbf16, #tpu.memory_space<vmem>>, vector<16x16xbf16>
    %cst = arith.constant dense<0.000000e+00> : vector<16x8xf32>
    %7 = tpu.matmul %6, %5, %cst {dimension_numbers = #tpu.dot_dimension_numbers<[1], [0], [0], [1], [0, 0, 1, 1], [], []>} : vector<16x16xbf16>, vector<16x8xbf16>, vector<16x8xf32> -> vector<16x8xf32>
    %8 = vector.extract_strided_slice %0 {offsets = [0, 0], sizes = [16, 1], strides = [1, 1]} : vector<168x1xf32> to vector<16x1xf32>
    %9 = vector.broadcast %8 : vector<16x1xf32> to vector<16x8xf32>
    %10 = arith.addf %7, %9 : vector<16x8xf32>
    %cst_8 = arith.constant 0.000000e+00 : f32
    %11 = vector.broadcast %cst_8 : f32 to vector<16x8xf32>
    %12 = arith.maximumf %10, %11 : vector<16x8xf32>
    %13 = arith.truncf %12 : vector<16x8xf32> to vector<16x8xbf16>
    %c0_9 = arith.constant 0 : index
    %c0_10 = arith.constant 0 : index
    %14 = vector.load %arg4[%c0_9, %c0_10] : memref<32x16xbf16, #tpu.memory_space<vmem>>, vector<32x16xbf16>
    %cst_11 = arith.constant dense<0.000000e+00> : vector<32x8xf32>
    %15 = tpu.matmul %14, %13, %cst_11 {dimension_numbers = #tpu.dot_dimension_numbers<[1], [0], [0], [1], [0, 0, 1, 1], [], []>} : vector<32x16xbf16>, vector<16x8xbf16>, vector<32x8xf32> -> vector<32x8xf32>
    %16 = vector.extract_strided_slice %0 {offsets = [16, 0], sizes = [32, 1], strides = [1, 1]} : vector<168x1xf32> to vector<32x1xf32>
    %17 = vector.broadcast %16 : vector<32x1xf32> to vector<32x8xf32>
    %18 = arith.addf %15, %17 : vector<32x8xf32>
    %cst_12 = arith.constant 0.000000e+00 : f32
    %19 = vector.broadcast %cst_12 : f32 to vector<32x8xf32>
    %20 = arith.maximumf %18, %19 : vector<32x8xf32>
    %21 = vector.extract_strided_slice %20 {offsets = [0, 0], sizes = [32, 2], strides = [1, 1]} : vector<32x8xf32> to vector<32x2xf32>
    %cst_13 = arith.constant dense<0xFF800000> : vector<32xf32>
    %22 = vector.multi_reduction <maximumf>, %21, %cst_13 [1] : vector<32x2xf32> to vector<32xf32>
    %23 = vector.shape_cast %22 : vector<32xf32> to vector<32x1xf32>
    %24 = vector.extract_strided_slice %20 {offsets = [0, 2], sizes = [32, 2], strides = [1, 1]} : vector<32x8xf32> to vector<32x2xf32>
    %cst_14 = arith.constant dense<0xFF800000> : vector<32xf32>
    %25 = vector.multi_reduction <maximumf>, %24, %cst_14 [1] : vector<32x2xf32> to vector<32xf32>
    %26 = vector.shape_cast %25 : vector<32xf32> to vector<32x1xf32>
    %27 = vector.extract_strided_slice %20 {offsets = [0, 4], sizes = [32, 2], strides = [1, 1]} : vector<32x8xf32> to vector<32x2xf32>
    %cst_15 = arith.constant dense<0xFF800000> : vector<32xf32>
    %28 = vector.multi_reduction <maximumf>, %27, %cst_15 [1] : vector<32x2xf32> to vector<32xf32>
    %29 = vector.shape_cast %28 : vector<32xf32> to vector<32x1xf32>
    %30 = vector.extract_strided_slice %20 {offsets = [0, 6], sizes = [32, 2], strides = [1, 1]} : vector<32x8xf32> to vector<32x2xf32>
    %cst_16 = arith.constant dense<0xFF800000> : vector<32xf32>
    %31 = vector.multi_reduction <maximumf>, %30, %cst_16 [1] : vector<32x2xf32> to vector<32xf32>
    %32 = vector.shape_cast %31 : vector<32xf32> to vector<32x1xf32>
    %33 = tpu.concatenate %23, %26, %29, %32 in 1 : vector<32x1xf32>, vector<32x1xf32>, vector<32x1xf32>, vector<32x1xf32> -> vector<32x4xf32>
    %34 = arith.index_cast %arg1 : i32 to index
    %c0_17 = arith.constant 0 : index
    %c0_18 = arith.constant 0 : index
    %35 = vector.load %arg13[%34, %c0_17, %c0_18] : memref<2x32x4xf32, #tpu.memory_space<vmem>>, vector<1x32x4xf32>
    %36 = vector.shape_cast %35 : vector<1x32x4xf32> to vector<32x4xf32>
    %37 = vector.shape_cast %33 : vector<32x4xf32> to vector<1x32x4xf32>
    tpu.vector_store %arg13[%34, %c0_17, %c0_18], %37 {strides = array<i32>} : memref<2x32x4xf32, #tpu.memory_space<vmem>>, vector<1x32x4xf32>,
    %38 = arith.truncf %20 : vector<32x8xf32> to vector<32x8xbf16>
    %c0_19 = arith.constant 0 : index
    %c0_20 = arith.constant 0 : index
    %39 = vector.load %arg5[%c0_19, %c0_20] : memref<64x32xbf16, #tpu.memory_space<vmem>>, vector<64x32xbf16>
    %cst_21 = arith.constant dense<0.000000e+00> : vector<64x8xf32>
    %40 = tpu.matmul %39, %38, %cst_21 {dimension_numbers = #tpu.dot_dimension_numbers<[1], [0], [0], [1], [0, 0, 1, 1], [], []>} : vector<64x32xbf16>, vector<32x8xbf16>, vector<64x8xf32> -> vector<64x8xf32>
    %41 = vector.extract_strided_slice %0 {offsets = [48, 0], sizes = [64, 1], strides = [1, 1]} : vector<168x1xf32> to vector<64x1xf32>
    %42 = vector.broadcast %41 : vector<64x1xf32> to vector<64x8xf32>
    %43 = arith.addf %40, %42 : vector<64x8xf32>
    %cst_22 = arith.constant 0.000000e+00 : f32
    %44 = vector.broadcast %cst_22 : f32 to vector<64x8xf32>
    %45 = arith.maximumf %43, %44 : vector<64x8xf32>
    %c0_23 = arith.constant 0 : index
    %c0_24 = arith.constant 0 : index
    %46 = vector.load %arg12[%c0_23, %c0_24] : memref<64x1xf32, #tpu.memory_space<vmem>>, vector<64x1xf32>
    %cst_25 = arith.constant dense<0xFF800000> : vector<64xf32>
    %47 = vector.multi_reduction <maximumf>, %45, %cst_25 [1] : vector<64x8xf32> to vector<64xf32>
    %48 = vector.shape_cast %47 : vector<64xf32> to vector<64x1xf32>
    %49 = arith.maximumf %46, %48 : vector<64x1xf32>
    %c0_26 = arith.constant 0 : index
    %c0_27 = arith.constant 0 : index
    %50 = vector.load %arg12[%c0_26, %c0_27] : memref<64x1xf32, #tpu.memory_space<vmem>>, vector<64x1xf32>
    tpu.vector_store %arg12[%c0_26, %c0_27], %49 {strides = array<i32>} : memref<64x1xf32, #tpu.memory_space<vmem>>, vector<64x1xf32>,
    %c1_i32 = arith.constant 1 : i32
    %51 = arith.cmpi eq, %arg1, %c1_i32 : i32
    %52 = arith.extui %51 : i1 to i32
    %c0_i32_28 = arith.constant 0 : i32
    %53 = arith.cmpi ne, %52, %c0_i32_28 : i32
    scf.if %53 {
      %c0_29 = arith.constant 0 : index
      %c0_30 = arith.constant 0 : index
      %c0_31 = arith.constant 0 : index
      %54 = vector.load %arg13[%c0_29, %c0_30, %c0_31] : memref<2x32x4xf32, #tpu.memory_space<vmem>>, vector<1x32x4xf32>
      %55 = vector.shape_cast %54 : vector<1x32x4xf32> to vector<32x4xf32>
      %c1 = arith.constant 1 : index
      %c0_32 = arith.constant 0 : index
      %c0_33 = arith.constant 0 : index
      %56 = vector.load %arg13[%c1, %c0_32, %c0_33] : memref<2x32x4xf32, #tpu.memory_space<vmem>>, vector<1x32x4xf32>
      %57 = vector.shape_cast %56 : vector<1x32x4xf32> to vector<32x4xf32>
      %58 = tpu.concatenate %55, %57 in 1 : vector<32x4xf32>, vector<32x4xf32> -> vector<32x8xf32>
      %59 = arith.truncf %58 : vector<32x8xf32> to vector<32x8xbf16>
      %c0_34 = arith.constant 0 : index
      %c0_35 = arith.constant 0 : index
      %60 = vector.load %arg12[%c0_34, %c0_35] : memref<64x1xf32, #tpu.memory_space<vmem>>, vector<64x1xf32>
      %61 = arith.truncf %60 : vector<64x1xf32> to vector<64x1xbf16>
      %c0_36 = arith.constant 0 : index
      %c0_37 = arith.constant 0 : index
      %62 = vector.load %arg6[%c0_36, %c0_37] : memref<32x32xbf16, #tpu.memory_space<vmem>>, vector<32x32xbf16>
      %cst_38 = arith.constant dense<0.000000e+00> : vector<32x8xf32>
      %63 = tpu.matmul %62, %59, %cst_38 {dimension_numbers = #tpu.dot_dimension_numbers<[1], [0], [0], [1], [0, 0, 1, 1], [], []>} : vector<32x32xbf16>, vector<32x8xbf16>, vector<32x8xf32> -> vector<32x8xf32>
      %c0_39 = arith.constant 0 : index
      %c0_40 = arith.constant 0 : index
      %64 = vector.load %arg7[%c0_39, %c0_40] : memref<32x64xbf16, #tpu.memory_space<vmem>>, vector<32x64xbf16>
      %cst_41 = arith.constant dense<0.000000e+00> : vector<32x1xf32>
      %65 = tpu.matmul %64, %61, %cst_41 {dimension_numbers = #tpu.dot_dimension_numbers<[1], [0], [0], [1], [0, 0, 1, 1], [], []>} : vector<32x64xbf16>, vector<64x1xbf16>, vector<32x1xf32> -> vector<32x1xf32>
      %66 = vector.broadcast %65 : vector<32x1xf32> to vector<32x8xf32>
      %67 = arith.addf %63, %66 : vector<32x8xf32>
      %68 = vector.extract_strided_slice %0 {offsets = [112, 0], sizes = [32, 1], strides = [1, 1]} : vector<168x1xf32> to vector<32x1xf32>
      %69 = vector.broadcast %68 : vector<32x1xf32> to vector<32x8xf32>
      %70 = arith.addf %67, %69 : vector<32x8xf32>
      %cst_42 = arith.constant 0.000000e+00 : f32
      %71 = vector.broadcast %cst_42 : f32 to vector<32x8xf32>
      %72 = arith.maximumf %70, %71 : vector<32x8xf32>
      %73 = arith.truncf %72 : vector<32x8xf32> to vector<32x8xbf16>
      %c0_43 = arith.constant 0 : index
      %c0_44 = arith.constant 0 : index
      %74 = vector.load %arg8[%c0_43, %c0_44] : memref<16x32xbf16, #tpu.memory_space<vmem>>, vector<16x32xbf16>
      %cst_45 = arith.constant dense<0.000000e+00> : vector<16x8xf32>
      %75 = tpu.matmul %74, %73, %cst_45 {dimension_numbers = #tpu.dot_dimension_numbers<[1], [0], [0], [1], [0, 0, 1, 1], [], []>} : vector<16x32xbf16>, vector<32x8xbf16>, vector<16x8xf32> -> vector<16x8xf32>
      %76 = vector.extract_strided_slice %0 {offsets = [144, 0], sizes = [16, 1], strides = [1, 1]} : vector<168x1xf32> to vector<16x1xf32>
      %77 = vector.broadcast %76 : vector<16x1xf32> to vector<16x8xf32>
      %78 = arith.addf %75, %77 : vector<16x8xf32>
      %cst_46 = arith.constant 0.000000e+00 : f32
      %79 = vector.broadcast %cst_46 : f32 to vector<16x8xf32>
      %80 = arith.maximumf %78, %79 : vector<16x8xf32>
      %81 = arith.truncf %80 : vector<16x8xf32> to vector<16x8xbf16>
      %c0_47 = arith.constant 0 : index
      %c0_48 = arith.constant 0 : index
      %82 = vector.load %arg9[%c0_47, %c0_48] : memref<8x16xbf16, #tpu.memory_space<vmem>>, vector<8x16xbf16>
      %cst_49 = arith.constant dense<0.000000e+00> : vector<8x8xf32>
      %83 = tpu.matmul %82, %81, %cst_49 {dimension_numbers = #tpu.dot_dimension_numbers<[1], [0], [0], [1], [0, 0, 1, 1], [], []>} : vector<8x16xbf16>, vector<16x8xbf16>, vector<8x8xf32> -> vector<8x8xf32>
      %84 = vector.extract_strided_slice %0 {offsets = [160, 0], sizes = [8, 1], strides = [1, 1]} : vector<168x1xf32> to vector<8x1xf32>
      %85 = vector.broadcast %84 : vector<8x1xf32> to vector<8x8xf32>
      %86 = arith.addf %83, %85 : vector<8x8xf32>
      %c0_50 = arith.constant 0 : index
      %c0_51 = arith.constant 0 : index
      %c0_52 = arith.constant 0 : index
      %87 = vector.load %arg11[%c0_50, %c0_51, %c0_52] : memref<1x8x8xf32, #tpu.memory_space<vmem>>, vector<1x8x8xf32>
      %88 = vector.shape_cast %87 : vector<1x8x8xf32> to vector<8x8xf32>
      %89 = vector.shape_cast %86 : vector<8x8xf32> to vector<1x8x8xf32>
      tpu.vector_store %arg11[%c0_50, %c0_51, %c0_52], %89 {strides = array<i32>} : memref<1x8x8xf32, #tpu.memory_space<vmem>>, vector<1x8x8xf32>,
    } else {
    }
    return
  }
  func.func @transform_0(%arg0: i32, %arg1: i32) -> (i32, i32, i32, i32) {
    %c0_i32 = arith.constant 0 : i32
    %c0_i32_0 = arith.constant 0 : i32
    %c0_i32_1 = arith.constant 0 : i32
    return %arg0, %arg1, %c0_i32, %c0_i32_0 : i32, i32, i32, i32
  }
  func.func @transform_1(%arg0: i32, %arg1: i32) -> (i32, i32) {
    %c0_i32 = arith.constant 0 : i32
    %c0_i32_0 = arith.constant 0 : i32
    %c0_i32_1 = arith.constant 0 : i32
    return %c0_i32, %c0_i32_0 : i32, i32
  }
  func.func @transform_2(%arg0: i32, %arg1: i32) -> (i32, i32) {
    %c0_i32 = arith.constant 0 : i32
    %c0_i32_0 = arith.constant 0 : i32
    %c0_i32_1 = arith.constant 0 : i32
    return %c0_i32, %c0_i32_0 : i32, i32
  }
  func.func @transform_3(%arg0: i32, %arg1: i32) -> (i32, i32) {
    %c0_i32 = arith.constant 0 : i32
    %c0_i32_0 = arith.constant 0 : i32
    %c0_i32_1 = arith.constant 0 : i32
    return %c0_i32, %c0_i32_0 : i32, i32
  }
  func.func @transform_4(%arg0: i32, %arg1: i32) -> (i32, i32) {
    %c0_i32 = arith.constant 0 : i32
    %c0_i32_0 = arith.constant 0 : i32
    %c0_i32_1 = arith.constant 0 : i32
    return %c0_i32, %c0_i32_0 : i32, i32
  }
  func.func @transform_5(%arg0: i32, %arg1: i32) -> (i32, i32) {
    %c0_i32 = arith.constant 0 : i32
    %c0_i32_0 = arith.constant 0 : i32
    %c0_i32_1 = arith.constant 0 : i32
    return %c0_i32, %c0_i32_0 : i32, i32
  }
  func.func @transform_6(%arg0: i32, %arg1: i32) -> (i32, i32) {
    %c0_i32 = arith.constant 0 : i32
    %c0_i32_0 = arith.constant 0 : i32
    %c0_i32_1 = arith.constant 0 : i32
    return %c0_i32, %c0_i32_0 : i32, i32
  }
  func.func @transform_7(%arg0: i32, %arg1: i32) -> (i32, i32) {
    %c0_i32 = arith.constant 0 : i32
    %c0_i32_0 = arith.constant 0 : i32
    %c0_i32_1 = arith.constant 0 : i32
    return %c0_i32, %c0_i32_0 : i32, i32
  }
  func.func @transform_8(%arg0: i32, %arg1: i32) -> (i32, i32) {
    %c0_i32 = arith.constant 0 : i32
    %c0_i32_0 = arith.constant 0 : i32
    %c0_i32_1 = arith.constant 0 : i32
    return %c0_i32, %c0_i32_0 : i32, i32
  }
  func.func @transform_9(%arg0: i32, %arg1: i32) -> (i32, i32, i32) {
    %c0_i32 = arith.constant 0 : i32
    %c0_i32_0 = arith.constant 0 : i32
    %c0_i32_1 = arith.constant 0 : i32
    return %arg0, %c0_i32, %c0_i32_0 : i32, i32, i32
  }
}

</mosaic_0001>

<llo_original>
// kernel: tpu_custom_call.1
$region0: #{tpu_custom_call.1}
  #allocation0 [shape = 'u32[]', space=smem, size = 0x4, offset = 0x4, fixed_abs, tag = 'smem constant byte address 0x4 - core index']
  #allocation1 [shape = 'u32[144,128]{1,0:T(1,128)}', space=vmem, size = 0x12000, scoped, tag = 'internal scratch']
  #allocation2 [shape = 'f32[64,1]{1,0:T(8,128)}', space=vmem, size = 0x8000, scoped, tag = 'scratch operand']
  #allocation3 [shape = 'f32[2,32,4]{2,1,0:T(8,128)}', space=vmem, size = 0x8000, scoped, tag = 'scratch operand']
  %s0 = inlined_call_operand.vmem [shape: bf16[2,2,16,8], index: 0, kind: input, shape index: {}]
  %s1 = inlined_call_operand.vmem [shape: bf16[16,16], index: 1, kind: input, shape index: {}]
  %s2 = inlined_call_operand.vmem [shape: bf16[32,16], index: 2, kind: input, shape index: {}]
  %s3 = inlined_call_operand.vmem [shape: bf16[64,32], index: 3, kind: input, shape index: {}]
  %s4 = inlined_call_operand.vmem [shape: bf16[32,32], index: 4, kind: input, shape index: {}]
  %s5 = inlined_call_operand.vmem [shape: bf16[32,64], index: 5, kind: input, shape index: {}]
  %s6 = inlined_call_operand.vmem [shape: bf16[16,32], index: 6, kind: input, shape index: {}]
  %s7 = inlined_call_operand.vmem [shape: bf16[8,16], index: 7, kind: input, shape index: {}]
  %s8 = inlined_call_operand.vmem [shape: f32[168,1], index: 8, kind: input, shape index: {}]
  %s9 = inlined_call_operand.hbm [shape: f32[2,8,8], index: 9, kind: output, shape index: {}]
  %s10 = sld [smem:[#allocation0]]
  $region77: #{tpu_custom_call.1} parent=0
    _
  %s12 = ssub.s32 1, %s10
  %s13 = scalar_select 0, %s12, %s10
  $region1: #{tpu_custom_call.1} parent=0
    #allocation4 [shape = 'u8[8192]{0}', space=vmem, size = 0x2000, scoped, tag = 'output window, operand 0']
    #allocation5 [shape = 's32[2]{0}', space=sflag, size = 0x8, scoped, tag = 'scoped memory for tpu_custom_call.1']
    %14 = vsyncpa [#allocation5], 0
    %s15 = scalar_lea.sflag [#allocation5], 1
    %16 = vsyncpa %s15, 0
    loop: start=0, step=1, limit=6
    $region2: #{tpu_custom_call.1} parent=1 // loop_pre_header
      _
    $region3: #{tpu_custom_call.1} parent=1 // loop_header
      %s18 = sphi 0, %s22
      %p19 = scmp.ge.s32.totalorder %s18, 6
      %s25 = sphi 0, %s37
      %s26 = sphi 0, %s33
      %s27 = sphi 0, %s25
      %s28 = sphi 0, %s26
      %s29 = sphi 0, %s27
      %s30 = sphi 0, %s28
      %s42 = sphi 0, %s44
      %s45 = sphi 0, %s42
      %s46 = sphi 0, %s45
      %s62 = sphi 0, %s46
      %s66 = sphi 0, %s66
      %s68 = sphi 0, %s66
      %s69 = sphi 0, %s68
      %s83 = sphi 0, %s69
      %s87 = sphi 0, %s87
      %s89 = sphi 0, %s87
      %s90 = sphi 0, %s89
      %s104 = sphi 0, %s90
      %s108 = sphi 0, %s108
      %s110 = sphi 0, %s108
      %s111 = sphi 0, %s110
      %s125 = sphi 0, %s111
      %s129 = sphi 0, %s129
      %s131 = sphi 0, %s129
      %s132 = sphi 0, %s131
      %s146 = sphi 0, %s132
      %s150 = sphi 0, %s150
      %s152 = sphi 0, %s150
      %s153 = sphi 0, %s152
      %s167 = sphi 0, %s153
      %s171 = sphi 0, %s171
      %s173 = sphi 0, %s171
      %s174 = sphi 0, %s173
      %s188 = sphi 0, %s174
      %s192 = sphi 0, %s192
      %s194 = sphi 0, %s192
      %s195 = sphi 0, %s194
      %s209 = sphi 0, %s195
      %s213 = sphi 0, %s213
      %s215 = sphi 0, %s213
      %s216 = sphi 0, %s215
      %s230 = sphi 0, %s216
      %s236 = sphi 0, %s238
      %s239 = sphi 0, %s236
      %s240 = sphi 0, %s239
      %s256 = sphi 0, %s240
    $region4: #{tpu_custom_call.1} parent=1 // loop_header_branch
      %21 = sbr.rel (%p19) target = $region8
    $region5: #{tpu_custom_call.1} parent=1 // loop_body
      %s23 = ssub.s32 %s18, 1
      %s24 = ssub.s32 %s18, 2
      %s31 = sadd.s32 1, %s26
      %p32 = scmp.ge.s32.totalorder %s31, 2
      %s33 = scalar_select %p32, 0, %s31
      %s34 = sadd.s32 1, %s25
      %s35 = scalar_select %p32, %s34, %s25
      %p36 = scmp.ge.s32.totalorder %s35, 2
      %s37 = scalar_select %p36, 0, %s35
      %s38 = ssub.s32 %s25, %s37
      %s39 = ssub.s32 %s26, %s33
      %s40 = sor.u32 %s38, %s39
      %p41 = scmp.eq.s32.totalorder %s40, 0
      %s43 = sadd.s32 %s42, 1
      %s44 = scalar_select %p41, %s42, %s43
      %p47 = pneg %p41
      %p48 = scmp.eq.s32.totalorder %s18, 3
      %p49 = por %p47, %p48
      %p50 = scmp.ne.s32.totalorder %s42, %s45
      %p51 = scmp.eq.s32.totalorder %s18, 0
      %p52 = por %p50, %p51
      %p53 = scmp.ne.s32.totalorder %s42, %s45
      %p54 = scmp.eq.s32.totalorder %s23, 3
      %p55 = por %p53, %p54
      %p56 = scmp.ne.s32.totalorder %s45, %s46
      %p57 = scmp.eq.s32.totalorder %s23, 0
      %p58 = por %p56, %p57
      %p59 = scmp.ne.s32.totalorder %s45, %s46
      %p60 = scmp.eq.s32.totalorder %s24, 3
      %p61 = por %p59, %p60
      %p63 = scmp.ne.s32.totalorder %s46, %s62
      %p64 = scmp.eq.s32.totalorder %s24, 0
      %p65 = por %p63, %p64
      %s67 = sadd.s32 %s66, 1
      %p70 = scmp.eq.s32.totalorder %s18, 3
      %p71 = scmp.ne.s32.totalorder %s66, %s68
      %p72 = scmp.eq.s32.totalorder %s18, 0
      %p73 = por %p71, %p72
      %p74 = scmp.ne.s32.totalorder %s66, %s68
      %p75 = scmp.eq.s32.totalorder %s23, 3
      %p76 = por %p74, %p75
      %p77 = scmp.ne.s32.totalorder %s68, %s69
      %p78 = scmp.eq.s32.totalorder %s23, 0
      %p79 = por %p77, %p78
      %p80 = scmp.ne.s32.totalorder %s68, %s69
      %p81 = scmp.eq.s32.totalorder %s24, 3
      %p82 = por %p80, %p81
      %p84 = scmp.ne.s32.totalorder %s69, %s83
      %p85 = scmp.eq.s32.totalorder %s24, 0
      %p86 = por %p84, %p85
      %s88 = sadd.s32 %s87, 1
      %p91 = scmp.eq.s32.totalorder %s18, 3
      %p92 = scmp.ne.s32.totalorder %s87, %s89
      %p93 = scmp.eq.s32.totalorder %s18, 0
      %p94 = por %p92, %p93
      %p95 = scmp.ne.s32.totalorder %s87, %s89
      %p96 = scmp.eq.s32.totalorder %s23, 3
      %p97 = por %p95, %p96
      %p98 = scmp.ne.s32.totalorder %s89, %s90
      %p99 = scmp.eq.s32.totalorder %s23, 0
      %p100 = por %p98, %p99
      %p101 = scmp.ne.s32.totalorder %s89, %s90
      %p102 = scmp.eq.s32.totalorder %s24, 3
      %p103 = por %p101, %p102
      %p105 = scmp.ne.s32.totalorder %s90, %s104
      %p106 = scmp.eq.s32.totalorder %s24, 0
      %p107 = por %p105, %p106
      %s109 = sadd.s32 %s108, 1
      %p112 = scmp.eq.s32.totalorder %s18, 3
      %p113 = scmp.ne.s32.totalorder %s108, %s110
      %p114 = scmp.eq.s32.totalorder %s18, 0
      %p115 = por %p113, %p114
      %p116 = scmp.ne.s32.totalorder %s108, %s110
      %p117 = scmp.eq.s32.totalorder %s23, 3
      %p118 = por %p116, %p117
      %p119 = scmp.ne.s32.totalorder %s110, %s111
      %p120 = scmp.eq.s32.totalorder %s23, 0
      %p121 = por %p119, %p120
      %p122 = scmp.ne.s32.totalorder %s110, %s111
      %p123 = scmp.eq.s32.totalorder %s24, 3
      %p124 = por %p122, %p123
      %p126 = scmp.ne.s32.totalorder %s111, %s125
      %p127 = scmp.eq.s32.totalorder %s24, 0
      %p128 = por %p126, %p127
      %s130 = sadd.s32 %s129, 1
      %p133 = scmp.eq.s32.totalorder %s18, 3
      %p134 = scmp.ne.s32.totalorder %s129, %s131
      %p135 = scmp.eq.s32.totalorder %s18, 0
      %p136 = por %p134, %p135
      %p137 = scmp.ne.s32.totalorder %s129, %s131
      %p138 = scmp.eq.s32.totalorder %s23, 3
      %p139 = por %p137, %p138
      %p140 = scmp.ne.s32.totalorder %s131, %s132
      %p141 = scmp.eq.s32.totalorder %s23, 0
      %p142 = por %p140, %p141
      %p143 = scmp.ne.s32.totalorder %s131, %s132
      %p144 = scmp.eq.s32.totalorder %s24, 3
      %p145 = por %p143, %p144
      %p147 = scmp.ne.s32.totalorder %s132, %s146
      %p148 = scmp.eq.s32.totalorder %s24, 0
      %p149 = por %p147, %p148
      %s151 = sadd.s32 %s150, 1
      %p154 = scmp.eq.s32.totalorder %s18, 3
      %p155 = scmp.ne.s32.totalorder %s150, %s152
      %p156 = scmp.eq.s32.totalorder %s18, 0
      %p157 = por %p155, %p156
      %p158 = scmp.ne.s32.totalorder %s150, %s152
      %p159 = scmp.eq.s32.totalorder %s23, 3
      %p160 = por %p158, %p159
      %p161 = scmp.ne.s32.totalorder %s152, %s153
      %p162 = scmp.eq.s32.totalorder %s23, 0
      %p163 = por %p161, %p162
      %p164 = scmp.ne.s32.totalorder %s152, %s153
      %p165 = scmp.eq.s32.totalorder %s24, 3
      %p166 = por %p164, %p165
      %p168 = scmp.ne.s32.totalorder %s153, %s167
      %p169 = scmp.eq.s32.totalorder %s24, 0
      %p170 = por %p168, %p169
      %s172 = sadd.s32 %s171, 1
      %p175 = scmp.eq.s32.totalorder %s18, 3
      %p176 = scmp.ne.s32.totalorder %s171, %s173
      %p177 = scmp.eq.s32.totalorder %s18, 0
      %p178 = por %p176, %p177
      %p179 = scmp.ne.s32.totalorder %s171, %s173
      %p180 = scmp.eq.s32.totalorder %s23, 3
      %p181 = por %p179, %p180
      %p182 = scmp.ne.s32.totalorder %s173, %s174
      %p183 = scmp.eq.s32.totalorder %s23, 0
      %p184 = por %p182, %p183
      %p185 = scmp.ne.s32.totalorder %s173, %s174
      %p186 = scmp.eq.s32.totalorder %s24, 3
      %p187 = por %p185, %p186
      %p189 = scmp.ne.s32.totalorder %s174, %s188
      %p190 = scmp.eq.s32.totalorder %s24, 0
      %p191 = por %p189, %p190
      %s193 = sadd.s32 %s192, 1
      %p196 = scmp.eq.s32.totalorder %s18, 3
      %p197 = scmp.ne.s32.totalorder %s192, %s194
      %p198 = scmp.eq.s32.totalorder %s18, 0
      %p199 = por %p197, %p198
      %p200 = scmp.ne.s32.totalorder %s192, %s194
      %p201 = scmp.eq.s32.totalorder %s23, 3
      %p202 = por %p200, %p201
      %p203 = scmp.ne.s32.totalorder %s194, %s195
      %p204 = scmp.eq.s32.totalorder %s23, 0
      %p205 = por %p203, %p204
      %p206 = scmp.ne.s32.totalorder %s194, %s195
      %p207 = scmp.eq.s32.totalorder %s24, 3
      %p208 = por %p206, %p207
      %p210 = scmp.ne.s32.totalorder %s195, %s209
      %p211 = scmp.eq.s32.totalorder %s24, 0
      %p212 = por %p210, %p211
      %s214 = sadd.s32 %s213, 1
      %p217 = scmp.eq.s32.totalorder %s18, 3
      %p218 = scmp.ne.s32.totalorder %s213, %s215
      %p219 = scmp.eq.s32.totalorder %s18, 0
      %p220 = por %p218, %p219
      %p221 = scmp.ne.s32.totalorder %s213, %s215
      %p222 = scmp.eq.s32.totalorder %s23, 3
      %p223 = por %p221, %p222
      %p224 = scmp.ne.s32.totalorder %s215, %s216
      %p225 = scmp.eq.s32.totalorder %s23, 0
      %p226 = por %p224, %p225
      %p227 = scmp.ne.s32.totalorder %s215, %s216
      %p228 = scmp.eq.s32.totalorder %s24, 3
      %p229 = por %p227, %p228
      %p231 = scmp.ne.s32.totalorder %s216, %s230
      %p232 = scmp.eq.s32.totalorder %s24, 0
      %p233 = por %p231, %p232
      %s234 = ssub.s32 %s25, %s37
      %p235 = scmp.eq.s32.totalorder %s234, 0
      %s237 = sadd.s32 %s236, 1
      %s238 = scalar_select %p235, %s236, %s237
      %p241 = pneg %p235
      %p242 = scmp.eq.s32.totalorder %s18, 3
      %p243 = por %p241, %p242
      %p244 = scmp.ne.s32.totalorder %s236, %s239
      %p245 = scmp.eq.s32.totalorder %s18, 0
      %p246 = por %p244, %p245
      %p247 = scmp.ne.s32.totalorder %s236, %s239
      %p248 = scmp.eq.s32.totalorder %s23, 3
      %p249 = por %p247, %p248
      %p250 = scmp.ne.s32.totalorder %s239, %s240
      %p251 = scmp.eq.s32.totalorder %s23, 0
      %p252 = por %p250, %p251
      %p253 = scmp.ne.s32.totalorder %s239, %s240
      %p254 = scmp.eq.s32.totalorder %s24, 3
      %p255 = por %p253, %p254
      %p257 = scmp.ne.s32.totalorder %s240, %s256
      %p258 = scmp.eq.s32.totalorder %s24, 0
      %p259 = por %p257, %p258
      %p260 = scmp.le.s32.totalorder 1, %s18
      %p261 = scmp.lt.s32.totalorder %s18, 5
      %p262 = pnand %p260, %p261
      %p263 = pneg %p262
      // Predicated region
      $region9: #{tpu_custom_call.1} parent=5 // pred_check
        _
      $region10: #{tpu_custom_call.1} parent=5 // pred_check_branch
        %265 = sbr.rel (%p262) target = $region12
      $region11: #{tpu_custom_call.1} parent=5 // pred_region
        %s266 = ssub.s32 %s18, 1
        // Predicated region
        $region13: #{tpu_custom_call.1} parent=11 // pred_check
          %p267 = pneg %p79
        $region14: #{tpu_custom_call.1} parent=11 // pred_check_branch
          %269 = sbr.rel (%p267) target = $region16
        $region15: #{tpu_custom_call.1} parent=11 // pred_region
          _
        $region16: #{tpu_custom_call.1} parent=11 // pred_fallthru
          _
        // Predicated region
        $region17: #{tpu_custom_call.1} parent=11 // pred_check
          %p270 = pneg %p100
        $region18: #{tpu_custom_call.1} parent=11 // pred_check_branch
          %272 = sbr.rel (%p270) target = $region20
        $region19: #{tpu_custom_call.1} parent=11 // pred_region
          _
        $region20: #{tpu_custom_call.1} parent=11 // pred_fallthru
          _
        // Predicated region
        $region21: #{tpu_custom_call.1} parent=11 // pred_check
          %p273 = pneg %p121
        $region22: #{tpu_custom_call.1} parent=11 // pred_check_branch
          %275 = sbr.rel (%p273) target = $region24
        $region23: #{tpu_custom_call.1} parent=11 // pred_region
          _
        $region24: #{tpu_custom_call.1} parent=11 // pred_fallthru
          _
        // Predicated region
        $region25: #{tpu_custom_call.1} parent=11 // pred_check
          %p276 = pneg %p142
        $region26: #{tpu_custom_call.1} parent=11 // pred_check_branch
          %278 = sbr.rel (%p276) target = $region28
        $region27: #{tpu_custom_call.1} parent=11 // pred_region
          _
        $region28: #{tpu_custom_call.1} parent=11 // pred_fallthru
          _
        // Predicated region
        $region29: #{tpu_custom_call.1} parent=11 // pred_check
          %p279 = pneg %p163
        $region30: #{tpu_custom_call.1} parent=11 // pred_check_branch
          %281 = sbr.rel (%p279) target = $region32
        $region31: #{tpu_custom_call.1} parent=11 // pred_region
          _
        $region32: #{tpu_custom_call.1} parent=11 // pred_fallthru
          _
        // Predicated region
        $region33: #{tpu_custom_call.1} parent=11 // pred_check
          %p282 = pneg %p184
        $region34: #{tpu_custom_call.1} parent=11 // pred_check_branch
          %284 = sbr.rel (%p282) target = $region36
        $region35: #{tpu_custom_call.1} parent=11 // pred_region
          _
        $region36: #{tpu_custom_call.1} parent=11 // pred_fallthru
          _
        // Predicated region
        $region37: #{tpu_custom_call.1} parent=11 // pred_check
          %p285 = pneg %p205
        $region38: #{tpu_custom_call.1} parent=11 // pred_check_branch
          %287 = sbr.rel (%p285) target = $region40
        $region39: #{tpu_custom_call.1} parent=11 // pred_region
          _
        $region40: #{tpu_custom_call.1} parent=11 // pred_fallthru
          _
        // Predicated region
        $region41: #{tpu_custom_call.1} parent=11 // pred_check
          %p288 = pneg %p226
        $region42: #{tpu_custom_call.1} parent=11 // pred_check_branch
          %290 = sbr.rel (%p288) target = $region44
        $region43: #{tpu_custom_call.1} parent=11 // pred_region
          _
        $region44: #{tpu_custom_call.1} parent=11 // pred_fallthru
          _
      $region12: #{tpu_custom_call.1} parent=5 // pred_fallthru
        _
      %p291 = scmp.lt.s32.totalorder %s18, 4
      // Predicated region
      $region45: #{tpu_custom_call.1} parent=5 // pred_check
        %p292 = pneg %p291
      $region46: #{tpu_custom_call.1} parent=5 // pred_check_branch
        %294 = sbr.rel (%p292) target = $region48
      $region47: #{tpu_custom_call.1} parent=5 // pred_region
        // Predicated region
        $region49: #{tpu_custom_call.1} parent=47 // pred_check
          %p295 = pneg %p52
        $region50: #{tpu_custom_call.1} parent=47 // pred_check_branch
          %297 = sbr.rel (%p295) target = $region52
        $region51: #{tpu_custom_call.1} parent=47 // pred_region
          %p298 = scmp.lt.s32.totalorder %s25, 1
          %s299 = scalar_select %p298, %s25, 1
          %p300 = scmp.lt.s32.totalorder %s26, 1
          %s301 = scalar_select %p300, %s26, 1
          %s302 = smul.addr %s301, 2
          %s303 = smul.addr %s299, 4
          %s304 = sadd.s32 %s302, %s303
          %s305 = smul.addr %s304, 4
          %s306 = scalar_lea.vmem %s0, %s305
        $region52: #{tpu_custom_call.1} parent=47 // pred_fallthru
          _
      $region48: #{tpu_custom_call.1} parent=5 // pred_fallthru
        _
      %p307 = scmp.le.s32.totalorder 1, %s18
      %p308 = scmp.lt.s32.totalorder %s18, 5
      %p309 = pnand %p307, %p308
      %p310 = pneg %p309
      // Predicated region
      $region53: #{tpu_custom_call.1} parent=5 // pred_check
        _
      $region54: #{tpu_custom_call.1} parent=5 // pred_check_branch
        %312 = sbr.rel (%p309) target = $region56
      $region55: #{tpu_custom_call.1} parent=5 // pred_region
        %s313 = ssub.s32 %s18, 1
        %p314 = scmp.lt.s32.totalorder %s27, 1
        %s315 = scalar_select %p314, %s27, 1
        %p316 = scmp.lt.s32.totalorder %s28, 1
        %s317 = scalar_select %p316, %s28, 1
        %s318 = smul.addr %s317, 2
        %s319 = smul.addr %s315, 4
        %s320 = sadd.s32 %s318, %s319
        %s321 = smul.addr %s320, 4
        %s322 = scalar_lea.vmem %s0, %s321
        %p323 = pneg %p58
        %p324 = pneg %p55
        %p325 = pneg %p79
        %p326 = pneg %p76
        %p327 = pneg %p100
        %p328 = pneg %p97
        %p329 = pneg %p121
        %p330 = pneg %p118
        %p331 = pneg %p142
        %p332 = pneg %p139
        %p333 = pneg %p163
        %p334 = pneg %p160
        %p335 = pneg %p184
        %p336 = pneg %p181
        %p337 = pneg %p205
        %p338 = pneg %p202
        %p339 = pneg %p226
        %p340 = pneg %p223
        %p341 = pneg %p252
        %p342 = pneg %p249
        %s343 = sand.u32 %s239, 1
        %s344 = scalar_lea.sflag [#allocation5], %s343
        %s345 = sand.u32 %s239, 1
        %s346 = smul.addr %s345, 8
        %s347 = scalar_lea.vmem [#allocation4], %s346
        %p348 = scmp.lt.s32.totalorder %s27, 1
        %s349 = scalar_select %p348, %s27, 1
        %p350 = scmp.lt.s32.totalorder %s28, 1
        %s351 = scalar_select %p350, %s28, 1
        %s352 = smul.addr %s351, 2
        %s353 = smul.addr %s349, 4
        %s354 = sadd.s32 %s352, %s353
        %s355 = smul.addr %s354, 4
        %s356 = scalar_lea.vmem %s0, %s355
        %v358 = vld [vmem:[%s8] sm:$0xff]
        %v359 = vld [vmem:[%s8 + $0x8] sm:$0xff]
        %v360 = vld [vmem:[%s8 + $0x10] sm:$0xff]
        %v361 = vld [vmem:[%s8 + $0x18] sm:$0xff]
        %v362 = vld [vmem:[%s8 + $0x20] sm:$0xff]
        %v363 = vld [vmem:[%s8 + $0x28] sm:$0xff]
        %v364 = vld [vmem:[%s8 + $0x30] sm:$0xff]
        %v365 = vld [vmem:[%s8 + $0x38] sm:$0xff]
        %v366 = vld [vmem:[%s8 + $0x40] sm:$0xff]
        %v367 = vld [vmem:[%s8 + $0x48] sm:$0xff]
        %v368 = vld [vmem:[%s8 + $0x50] sm:$0xff]
        %v369 = vld [vmem:[%s8 + $0x58] sm:$0xff]
        %v370 = vld [vmem:[%s8 + $0x60] sm:$0xff]
        %v371 = vld [vmem:[%s8 + $0x68] sm:$0xff]
        %v372 = vld [vmem:[%s8 + $0x70] sm:$0xff]
        %v373 = vld [vmem:[%s8 + $0x78] sm:$0xff]
        %v374 = vld [vmem:[%s8 + $0x80] sm:$0xff]
        %v375 = vld [vmem:[%s8 + $0x88] sm:$0xff]
        %v376 = vld [vmem:[%s8 + $0x90] sm:$0xff]
        %v377 = vld [vmem:[%s8 + $0x98] sm:$0xff]
        %v378 = vld [vmem:[%s8 + $0xa0] sm:$0xff]
        %p379 = scmp.eq.s32.totalorder %s28, 0
        // Predicated region
        $region57: #{tpu_custom_call.1} parent=55 // pred_check
          %p380 = pneg %p379
        $region58: #{tpu_custom_call.1} parent=55 // pred_check_branch
          %382 = sbr.rel (%p380) target = $region60
        $region59: #{tpu_custom_call.1} parent=55 // pred_region
          %vm383 = vcmask 7168
          %384 = vst.msk [vmem:[#allocation2] sm:$0xff] %vm383, -inf
          %385 = vst.msk [vmem:[#allocation2 + $0x8] sm:$0xff] %vm383, -inf
          %386 = vst.msk [vmem:[#allocation2 + $0x10] sm:$0xff] %vm383, -inf
          %387 = vst.msk [vmem:[#allocation2 + $0x18] sm:$0xff] %vm383, -inf
          %388 = vst.msk [vmem:[#allocation2 + $0x20] sm:$0xff] %vm383, -inf
          %389 = vst.msk [vmem:[#allocation2 + $0x28] sm:$0xff] %vm383, -inf
          %390 = vst.msk [vmem:[#allocation2 + $0x30] sm:$0xff] %vm383, -inf
          %391 = vst.msk [vmem:[#allocation2 + $0x38] sm:$0xff] %vm383, -inf
        $region60: #{tpu_custom_call.1} parent=55 // pred_fallthru
          _
        %v392 = vld [vmem:[%s356] sm:$0xf]
        %v393 = vld [vmem:[%s356 + $0x4] sm:$0xf]
        %v394 = vld [vmem:[%s1] sm:$0xf]
        %v395 = vld [vmem:[%s1 + $0x4] sm:$0xf]
        %397 = vset.pattern.permute.xlu0 0
        %398 = vperm.xlu0 %397, %v358
        %v399 = vpop.permute.xlu0 %398
        %402 = vset.pattern.permute.xlu0 0
        %403 = vperm.xlu0 %402, %v359
        %v404 = vpop.permute.xlu0 %403
        %v408 = vunpack.c.l.b16 %v394
        %v409 = vunpack.c.l.b16 %v395
        %v410 = vpack.c.b16 %v409, %v408
        %v413 = vunpack.c.l.b16 %v392
        %v414 = vunpack.c.l.b16 %v393
        %v415 = vpack.c.b16 %v414, %v413
        %vm417 = vcmask 130048
        %v419 = vsel %vm417, %v410, 0
        %421 = vmatprep.subr.bf16.mxu0 0
        %422 = vmatpush1.bf16.msra.mxu0 %v415
        %423 = vmatprep.subr.bf16.mxu0 0
        %424 = vmatpush1.bf16.msra.mxu0 0
        %425 = vmatprep.subr.bf16.mxu0 0
        %426 = vmatpush1.bf16.msra.mxu0 0
        %427 = vmatprep.subr.bf16.mxu0 0
        %428 = vmatpush1.bf16.msra.mxu0 0
        %429 = vmatprep.subr.bf16.mxu0 0
        %430 = vmatpush1.bf16.msra.mxu0 0
        %431 = vmatprep.subr.bf16.mxu0 0
        %432 = vmatpush1.bf16.msra.mxu0 0
        %433 = vmatprep.subr.bf16.mxu0 0
        %434 = vmatpush1.bf16.msra.mxu0 0
        %435 = vmatprep.subr.bf16.mxu0 0
        %436 = vmatpush1.bf16.msra.mxu0 0
        %437 = vmatprep.subr.bf16.mxu0 0
        %438 = vmatpush1.bf16.msra.mxu0 0
        %439 = vmatprep.subr.bf16.mxu0 0
        %440 = vmatpush1.bf16.msra.mxu0 0
        %441 = vmatprep.subr.bf16.mxu0 0
        %442 = vmatpush1.bf16.msra.mxu0 0
        %443 = vmatprep.subr.bf16.mxu0 0
        %444 = vmatpush1.bf16.msra.mxu0 0
        %445 = vmatprep.subr.bf16.mxu0 0
        %446 = vmatpush1.bf16.msra.mxu0 0
        %447 = vmatprep.subr.bf16.mxu0 0
        %448 = vmatpush1.bf16.msra.mxu0 0
        %449 = vmatprep.subr.bf16.mxu0 0
        %450 = vmatpush1.bf16.msra.mxu0 0
        %451 = vmatprep.subr.bf16.mxu0 0
        %452 = vmatpush1.bf16.msra.mxu0 0
        %453 = vmatprep.mubr.bf16.mxu0 0
        %454 = vmatmul.mubr.bf16.gmra.mrb[0].mxu0 %v419
        %v455 = vpop.f32.mrb[0].mxu0
        %v456 = vadd.f32 %v399, %v455
        %v457 = vpop.f32.mrb[0].mxu0
        %v458 = vpop.f32.mrb[0].mxu0
        %v459 = vadd.f32 %v404, %v458
        %v460 = vpop.f32.mrb[0].mxu0
        %461 = vdwg.mxu0
        %v462 = vmax.f32 %v456, 0.0
        %v463 = vmax.f32 %v459, 0.0
        %v464 = vpack.c.bf16 %v463, %v462
        %v465 = vld [vmem:[%s2] sm:$0xf]
        %v466 = vld [vmem:[%s2 + $0x4] sm:$0xf]
        %v467 = vld [vmem:[%s2 + $0x8] sm:$0xf]
        %v468 = vld [vmem:[%s2 + $0xc] sm:$0xf]
        %470 = vset.pattern.permute.xlu0 0
        %471 = vperm.xlu0 %470, %v360
        %v472 = vpop.permute.xlu0 %471
        %475 = vset.pattern.permute.xlu0 0
        %476 = vperm.xlu0 %475, %v361
        %v477 = vpop.permute.xlu0 %476
        %480 = vset.pattern.permute.xlu0 0
        %481 = vperm.xlu0 %480, %v362
        %v482 = vpop.permute.xlu0 %481
        %485 = vset.pattern.permute.xlu0 0
        %486 = vperm.xlu0 %485, %v363
        %v487 = vpop.permute.xlu0 %486
        %v493 = vunpack.c.l.b16 %v465
        %v494 = vunpack.c.l.b16 %v466
        %v495 = vunpack.c.l.b16 %v467
        %v496 = vunpack.c.l.b16 %v468
        %v497 = vpack.c.b16 %v494, %v493
        %v498 = vpack.c.b16 %v496, %v495
        %v500 = vsel %vm417, %v497, 0
        %v503 = vsel %vm417, %v498, 0
        %505 = vmatprep.subr.bf16.mxu0 0
        %506 = vmatpush1.bf16.msra.mxu0 %v464
        %507 = vmatprep.subr.bf16.mxu0 0
        %508 = vmatpush1.bf16.msra.mxu0 0
        %509 = vmatprep.subr.bf16.mxu0 0
        %510 = vmatpush1.bf16.msra.mxu0 0
        %511 = vmatprep.subr.bf16.mxu0 0
        %512 = vmatpush1.bf16.msra.mxu0 0
        %513 = vmatprep.subr.bf16.mxu0 0
        %514 = vmatpush1.bf16.msra.mxu0 0
        %515 = vmatprep.subr.bf16.mxu0 0
        %516 = vmatpush1.bf16.msra.mxu0 0
        %517 = vmatprep.subr.bf16.mxu0 0
        %518 = vmatpush1.bf16.msra.mxu0 0
        %519 = vmatprep.subr.bf16.mxu0 0
        %520 = vmatpush1.bf16.msra.mxu0 0
        %521 = vmatprep.subr.bf16.mxu0 0
        %522 = vmatpush1.bf16.msra.mxu0 0
        %523 = vmatprep.subr.bf16.mxu0 0
        %524 = vmatpush1.bf16.msra.mxu0 0
        %525 = vmatprep.subr.bf16.mxu0 0
        %526 = vmatpush1.bf16.msra.mxu0 0
        %527 = vmatprep.subr.bf16.mxu0 0
        %528 = vmatpush1.bf16.msra.mxu0 0
        %529 = vmatprep.subr.bf16.mxu0 0
        %530 = vmatpush1.bf16.msra.mxu0 0
        %531 = vmatprep.subr.bf16.mxu0 0
        %532 = vmatpush1.bf16.msra.mxu0 0
        %533 = vmatprep.subr.bf16.mxu0 0
        %534 = vmatpush1.bf16.msra.mxu0 0
        %535 = vmatprep.subr.bf16.mxu0 0
        %536 = vmatpush1.bf16.msra.mxu0 0
        %537 = vmatprep.mubr.bf16.mxu0 0
        %538 = vmatmul.mubr.bf16.gmra.mrb[0].mxu0 %v500
        %v539 = vpop.f32.mrb[0].mxu0
        %v540 = vadd.f32 %v472, %v539
        %v541 = vpop.f32.mrb[0].mxu0
        %v542 = vpop.f32.mrb[0].mxu0
        %v543 = vadd.f32 %v477, %v542
        %v544 = vpop.f32.mrb[0].mxu0
        %545 = vmatprep.mubr.bf16.mxu0 0
        %546 = vmatmul.mubr.bf16.gmra.mrb[0].mxu0 %v503
        %v547 = vpop.f32.mrb[0].mxu0
        %v548 = vadd.f32 %v482, %v547
        %v549 = vpop.f32.mrb[0].mxu0
        %v550 = vpop.f32.mrb[0].mxu0
        %v551 = vadd.f32 %v487, %v550
        %v552 = vpop.f32.mrb[0].mxu0
        %553 = vdwg.mxu0
        %v554 = vmax.f32 %v540, 0.0
        %v555 = vmax.f32 %v543, 0.0
        %v556 = vmax.f32 %v548, 0.0
        %v557 = vmax.f32 %v551, 0.0
        %vm558 = vcmask 15360
        %v559 = vsel %vm558, %v554, -inf
        %560 = vmax.xlane.f32.xlu0 %v559
        %v561 = vpop.xlane.xlu0 %560
        %v562 = vsel %vm558, %v555, -inf
        %563 = vmax.xlane.f32.xlu0 %v562
        %v564 = vpop.xlane.xlu0 %563
        %v565 = vsel %vm558, %v556, -inf
        %566 = vmax.xlane.f32.xlu0 %v565
        %v567 = vpop.xlane.xlu0 %566
        %v568 = vsel %vm558, %v557, -inf
        %569 = vmax.xlane.f32.xlu0 %v568
        %v570 = vpop.xlane.xlu0 %569
        %vm571 = vcmask 31760
        %v572 = vsel %vm571, %v554, -inf
        %573 = vmax.xlane.f32.xlu0 %v572
        %v574 = vpop.xlane.xlu0 %573
        %v575 = vsel %vm571, %v555, -inf
        %576 = vmax.xlane.f32.xlu0 %v575
        %v577 = vpop.xlane.xlu0 %576
        %v578 = vsel %vm571, %v556, -inf
        %579 = vmax.xlane.f32.xlu0 %v578
        %v580 = vpop.xlane.xlu0 %579
        %v581 = vsel %vm571, %v557, -inf
        %582 = vmax.xlane.f32.xlu0 %v581
        %v583 = vpop.xlane.xlu0 %582
        %vm584 = vcmask 48160
        %v585 = vsel %vm584, %v554, -inf
        %586 = vmax.xlane.f32.xlu0 %v585
        %v587 = vpop.xlane.xlu0 %586
        %v588 = vsel %vm584, %v555, -inf
        %589 = vmax.xlane.f32.xlu0 %v588
        %v590 = vpop.xlane.xlu0 %589
        %v591 = vsel %vm584, %v556, -inf
        %592 = vmax.xlane.f32.xlu0 %v591
        %v593 = vpop.xlane.xlu0 %592
        %v594 = vsel %vm584, %v557, -inf
        %595 = vmax.xlane.f32.xlu0 %v594
        %v596 = vpop.xlane.xlu0 %595
        %vm597 = vcmask 64560
        %v598 = vsel %vm597, %v554, -inf
        %599 = vmax.xlane.f32.xlu0 %v598
        %v600 = vpop.xlane.xlu0 %599
        %v601 = vsel %vm597, %v555, -inf
        %602 = vmax.xlane.f32.xlu0 %v601
        %v603 = vpop.xlane.xlu0 %602
        %v604 = vsel %vm597, %v556, -inf
        %605 = vmax.xlane.f32.xlu0 %v604
        %v606 = vpop.xlane.xlu0 %605
        %v607 = vsel %vm597, %v557, -inf
        %608 = vmax.xlane.f32.xlu0 %v607
        %v609 = vpop.xlane.xlu0 %608
        %vm610 = vcmask 7168
        %v611 = vsel %vm610, %v561, %v574
        %v612 = vsel %vm610, %v564, %v577
        %v613 = vsel %vm610, %v567, %v580
        %v614 = vsel %vm610, %v570, %v583
        %v615 = vsel %vm558, %v611, %v587
        %v616 = vsel %vm558, %v612, %v590
        %v617 = vsel %vm558, %v613, %v593
        %v618 = vsel %vm558, %v614, %v596
        %vm619 = vcmask 23552
        %v620 = vsel %vm619, %v615, %v600
        %v621 = vsel %vm619, %v616, %v603
        %v622 = vsel %vm619, %v617, %v606
        %v623 = vsel %vm619, %v618, %v609
        %s624 = smul.u32 %s28, 32
        %s625 = scalar_lea.vmem [#allocation3], %s624
        %vm626 = vcmask 31744
        %627 = vst.msk [vmem:[%s625] sm:$0xff] %vm626, %v620
        %628 = vst.msk [vmem:[%s625 + $0x8] sm:$0xff] %vm626, %v621
        %629 = vst.msk [vmem:[%s625 + $0x10] sm:$0xff] %vm626, %v622
        %630 = vst.msk [vmem:[%s625 + $0x18] sm:$0xff] %vm626, %v623
        %v631 = vpack.c.bf16 %v555, %v554
        %v632 = vpack.c.bf16 %v557, %v556
        %v633 = vld [vmem:[%s3] sm:$0xf]
        %v634 = vld [vmem:[%s3 + $0x4] sm:$0xf]
        %v635 = vld [vmem:[%s3 + $0x8] sm:$0xf]
        %v636 = vld [vmem:[%s3 + $0xc] sm:$0xf]
        %v637 = vld [vmem:[%s3 + $0x10] sm:$0xf]
        %v638 = vld [vmem:[%s3 + $0x14] sm:$0xf]
        %v639 = vld [vmem:[%s3 + $0x18] sm:$0xf]
        %v640 = vld [vmem:[%s3 + $0x1c] sm:$0xf]
        %642 = vset.pattern.permute.xlu0 0
        %643 = vperm.xlu0 %642, %v364
        %v644 = vpop.permute.xlu0 %643
        %647 = vset.pattern.permute.xlu0 0
        %648 = vperm.xlu0 %647, %v365
        %v649 = vpop.permute.xlu0 %648
        %652 = vset.pattern.permute.xlu0 0
        %653 = vperm.xlu0 %652, %v366
        %v654 = vpop.permute.xlu0 %653
        %657 = vset.pattern.permute.xlu0 0
        %658 = vperm.xlu0 %657, %v367
        %v659 = vpop.permute.xlu0 %658
        %662 = vset.pattern.permute.xlu0 0
        %663 = vperm.xlu0 %662, %v368
        %v664 = vpop.permute.xlu0 %663
        %667 = vset.pattern.permute.xlu0 0
        %668 = vperm.xlu0 %667, %v369
        %v669 = vpop.permute.xlu0 %668
        %672 = vset.pattern.permute.xlu0 0
        %673 = vperm.xlu0 %672, %v370
        %v674 = vpop.permute.xlu0 %673
        %677 = vset.pattern.permute.xlu0 0
        %678 = vperm.xlu0 %677, %v371
        %v679 = vpop.permute.xlu0 %678
        %v689 = vunpack.c.l.b16 %v633
        %v690 = vunpack.c.l.b16 %v634
        %v691 = vunpack.c.l.b16 %v635
        %v692 = vunpack.c.l.b16 %v636
        %v693 = vunpack.c.l.b16 %v637
        %v694 = vunpack.c.l.b16 %v638
        %v695 = vunpack.c.l.b16 %v639
        %v696 = vunpack.c.l.b16 %v640
        %v697 = vpack.c.b16 %v690, %v689
        %v698 = vpack.c.b16 %v692, %v691
        %v699 = vpack.c.b16 %v694, %v693
        %v700 = vpack.c.b16 %v696, %v695
        %vm701 = vcmask 261120
        %v703 = vsel %vm701, %v697, 0
        %v706 = vsel %vm701, %v698, 0
        %v709 = vsel %vm701, %v699, 0
        %v712 = vsel %vm701, %v700, 0
        %714 = vmatprep.subr.bf16.mxu0 0
        %715 = vmatpush1.bf16.msra.mxu0 %v631
        %716 = vmatprep.subr.bf16.mxu0 0
        %717 = vmatpush1.bf16.msra.mxu0 %v632
        %718 = vmatprep.subr.bf16.mxu0 0
        %719 = vmatpush1.bf16.msra.mxu0 0
        %720 = vmatprep.subr.bf16.mxu0 0
        %721 = vmatpush1.bf16.msra.mxu0 0
        %722 = vmatprep.subr.bf16.mxu0 0
        %723 = vmatpush1.bf16.msra.mxu0 0
        %724 = vmatprep.subr.bf16.mxu0 0
        %725 = vmatpush1.bf16.msra.mxu0 0
        %726 = vmatprep.subr.bf16.mxu0 0
        %727 = vmatpush1.bf16.msra.mxu0 0
        %728 = vmatprep.subr.bf16.mxu0 0
        %729 = vmatpush1.bf16.msra.mxu0 0
        %730 = vmatprep.subr.bf16.mxu0 0
        %731 = vmatpush1.bf16.msra.mxu0 0
        %732 = vmatprep.subr.bf16.mxu0 0
        %733 = vmatpush1.bf16.msra.mxu0 0
        %734 = vmatprep.subr.bf16.mxu0 0
        %735 = vmatpush1.bf16.msra.mxu0 0
        %736 = vmatprep.subr.bf16.mxu0 0
        %737 = vmatpush1.bf16.msra.mxu0 0
        %738 = vmatprep.subr.bf16.mxu0 0
        %739 = vmatpush1.bf16.msra.mxu0 0
        %740 = vmatprep.subr.bf16.mxu0 0
        %741 = vmatpush1.bf16.msra.mxu0 0
        %742 = vmatprep.subr.bf16.mxu0 0
        %743 = vmatpush1.bf16.msra.mxu0 0
        %744 = vmatprep.subr.bf16.mxu0 0
        %745 = vmatpush1.bf16.msra.mxu0 0
        %746 = vmatprep.mubr.bf16.mxu0 0
        %747 = vmatmul.mubr.bf16.gmra.mrb[0].mxu0 %v703
        %v748 = vpop.f32.mrb[0].mxu0
        %v749 = vadd.f32 %v644, %v748
        %v750 = vpop.f32.mrb[0].mxu0
        %v751 = vpop.f32.mrb[0].mxu0
        %v752 = vadd.f32 %v649, %v751
        %v753 = vpop.f32.mrb[0].mxu0
        %754 = vmatprep.mubr.bf16.mxu0 0
        %755 = vmatmul.mubr.bf16.gmra.mrb[0].mxu0 %v706
        %v756 = vpop.f32.mrb[0].mxu0
        %v757 = vadd.f32 %v654, %v756
        %v758 = vpop.f32.mrb[0].mxu0
        %v759 = vpop.f32.mrb[0].mxu0
        %v760 = vadd.f32 %v659, %v759
        %v761 = vpop.f32.mrb[0].mxu0
        %762 = vmatprep.mubr.bf16.mxu0 0
        %763 = vmatmul.mubr.bf16.gmra.mrb[0].mxu0 %v709
        %v764 = vpop.f32.mrb[0].mxu0
        %v765 = vadd.f32 %v664, %v764
        %v766 = vpop.f32.mrb[0].mxu0
        %v767 = vpop.f32.mrb[0].mxu0
        %v768 = vadd.f32 %v669, %v767
        %v769 = vpop.f32.mrb[0].mxu0
        %770 = vmatprep.mubr.bf16.mxu0 0
        %771 = vmatmul.mubr.bf16.gmra.mrb[0].mxu0 %v712
        %v772 = vpop.f32.mrb[0].mxu0
        %v773 = vadd.f32 %v674, %v772
        %v774 = vpop.f32.mrb[0].mxu0
        %v775 = vpop.f32.mrb[0].mxu0
        %v776 = vadd.f32 %v679, %v775
        %v777 = vpop.f32.mrb[0].mxu0
        %778 = vdwg.mxu0
        %v779 = vmax.f32 %v749, 0.0
        %v780 = vmax.f32 %v752, 0.0
        %v781 = vmax.f32 %v757, 0.0
        %v782 = vmax.f32 %v760, 0.0
        %v783 = vmax.f32 %v765, 0.0
        %v784 = vmax.f32 %v768, 0.0
        %v785 = vmax.f32 %v773, 0.0
        %v786 = vmax.f32 %v776, 0.0
        %v787 = vld [vmem:[#allocation2] sm:$0xff]
        %v788 = vld [vmem:[#allocation2 + $0x8] sm:$0xff]
        %v789 = vld [vmem:[#allocation2 + $0x10] sm:$0xff]
        %v790 = vld [vmem:[#allocation2 + $0x18] sm:$0xff]
        %v791 = vld [vmem:[#allocation2 + $0x20] sm:$0xff]
        %v792 = vld [vmem:[#allocation2 + $0x28] sm:$0xff]
        %v793 = vld [vmem:[#allocation2 + $0x30] sm:$0xff]
        %v794 = vld [vmem:[#allocation2 + $0x38] sm:$0xff]
        %vm795 = vcmask 64512
        %v796 = vsel %vm795, %v779, -inf
        %797 = vmax.xlane.f32.xlu0 %v796
        %v798 = vpop.xlane.xlu0 %797
        %v799 = vsel %vm795, %v780, -inf
        %800 = vmax.xlane.f32.xlu0 %v799
        %v801 = vpop.xlane.xlu0 %800
        %v802 = vsel %vm795, %v781, -inf
        %803 = vmax.xlane.f32.xlu0 %v802
        %v804 = vpop.xlane.xlu0 %803
        %v805 = vsel %vm795, %v782, -inf
        %806 = vmax.xlane.f32.xlu0 %v805
        %v807 = vpop.xlane.xlu0 %806
        %v808 = vsel %vm795, %v783, -inf
        %809 = vmax.xlane.f32.xlu0 %v808
        %v810 = vpop.xlane.xlu0 %809
        %v811 = vsel %vm795, %v784, -inf
        %812 = vmax.xlane.f32.xlu0 %v811
        %v813 = vpop.xlane.xlu0 %812
        %v814 = vsel %vm795, %v785, -inf
        %815 = vmax.xlane.f32.xlu0 %v814
        %v816 = vpop.xlane.xlu0 %815
        %v817 = vsel %vm795, %v786, -inf
        %818 = vmax.xlane.f32.xlu0 %v817
        %v819 = vpop.xlane.xlu0 %818
        %v820 = vmax.f32 %v787, %v798
        %v821 = vmax.f32 %v788, %v801
        %v822 = vmax.f32 %v789, %v804
        %v823 = vmax.f32 %v790, %v807
        %v824 = vmax.f32 %v791, %v810
        %v825 = vmax.f32 %v792, %v813
        %v826 = vmax.f32 %v793, %v816
        %v827 = vmax.f32 %v794, %v819
        %828 = vst.msk [vmem:[#allocation2] sm:$0xff] %vm610, %v820
        %829 = vst.msk [vmem:[#allocation2 + $0x8] sm:$0xff] %vm610, %v821
        %830 = vst.msk [vmem:[#allocation2 + $0x10] sm:$0xff] %vm610, %v822
        %831 = vst.msk [vmem:[#allocation2 + $0x18] sm:$0xff] %vm610, %v823
        %832 = vst.msk [vmem:[#allocation2 + $0x20] sm:$0xff] %vm610, %v824
        %833 = vst.msk [vmem:[#allocation2 + $0x28] sm:$0xff] %vm610, %v825
        %834 = vst.msk [vmem:[#allocation2 + $0x30] sm:$0xff] %vm610, %v826
        %835 = vst.msk [vmem:[#allocation2 + $0x38] sm:$0xff] %vm610, %v827
        %p836 = scmp.eq.s32.totalorder %s28, 1
        // Predicated region
        $region61: #{tpu_custom_call.1} parent=55 // pred_check
          %p837 = pneg %p836
        $region62: #{tpu_custom_call.1} parent=55 // pred_check_branch
          %839 = sbr.rel (%p837) target = $region64
        $region63: #{tpu_custom_call.1} parent=55 // pred_region
          %v840 = vld [vmem:[#allocation3] sm:$0xff]
          %v841 = vld [vmem:[#allocation3 + $0x8] sm:$0xff]
          %v842 = vld [vmem:[#allocation3 + $0x10] sm:$0xff]
          %v843 = vld [vmem:[#allocation3 + $0x18] sm:$0xff]
          %s844 = scalar_lea.vmem [#allocation3], 32
          %v845 = vld [vmem:[%s844] sm:$0xff]
          %v846 = vld [vmem:[%s844 + $0x8] sm:$0xff]
          %v847 = vld [vmem:[%s844 + $0x10] sm:$0xff]
          %v848 = vld [vmem:[%s844 + $0x18] sm:$0xff]
          %853 = vrot.lane.b32.xlu0 %v845, 4
          %v854 = vpop.permute.xlu0 %853
          %855 = vrot.lane.b32.xlu0 %v846, 4
          %v856 = vpop.permute.xlu0 %855
          %857 = vrot.lane.b32.xlu0 %v847, 4
          %v858 = vpop.permute.xlu0 %857
          %859 = vrot.lane.b32.xlu0 %v848, 4
          %v860 = vpop.permute.xlu0 %859
          %v865 = vsel %vm626, %v840, %v854
          %v866 = vsel %vm626, %v841, %v856
          %v867 = vsel %vm626, %v842, %v858
          %v868 = vsel %vm626, %v843, %v860
          %v869 = vpack.c.bf16 %v866, %v865
          %v870 = vpack.c.bf16 %v868, %v867
          %v871 = vld [vmem:[#allocation2] sm:$0xff]
          %v872 = vld [vmem:[#allocation2 + $0x8] sm:$0xff]
          %v873 = vld [vmem:[#allocation2 + $0x10] sm:$0xff]
          %v874 = vld [vmem:[#allocation2 + $0x18] sm:$0xff]
          %v875 = vld [vmem:[#allocation2 + $0x20] sm:$0xff]
          %v876 = vld [vmem:[#allocation2 + $0x28] sm:$0xff]
          %v877 = vld [vmem:[#allocation2 + $0x30] sm:$0xff]
          %v878 = vld [vmem:[#allocation2 + $0x38] sm:$0xff]
          %v879 = vpack.c.bf16 %v872, %v871
          %v880 = vpack.c.bf16 %v874, %v873
          %v881 = vpack.c.bf16 %v876, %v875
          %v882 = vpack.c.bf16 %v878, %v877
          %v883 = vld [vmem:[%s4] sm:$0xf]
          %v884 = vld [vmem:[%s4 + $0x4] sm:$0xf]
          %v885 = vld [vmem:[%s4 + $0x8] sm:$0xf]
          %v886 = vld [vmem:[%s4 + $0xc] sm:$0xf]
          %v887 = vld [vmem:[%s5] sm:$0xf]
          %v888 = vld [vmem:[%s5 + $0x4] sm:$0xf]
          %v889 = vld [vmem:[%s5 + $0x8] sm:$0xf]
          %v890 = vld [vmem:[%s5 + $0xc] sm:$0xf]
          %v895 = vunpack.c.l.b16 %v887
          %v896 = vunpack.c.l.b16 %v888
          %v897 = vunpack.c.l.b16 %v889
          %v898 = vunpack.c.l.b16 %v890
          %v899 = vpack.c.b16 %v896, %v895
          %v900 = vpack.c.b16 %v898, %v897
          %vm901 = vcmask 523264
          %v903 = vsel %vm901, %v899, 0
          %v906 = vsel %vm901, %v900, 0
          %908 = vmatprep.subr.bf16.mxu0 0
          %909 = vmatpush1.bf16.msra.mxu0 %v879
          %910 = vmatprep.subr.bf16.mxu0 0
          %911 = vmatpush1.bf16.msra.mxu0 %v880
          %912 = vmatprep.subr.bf16.mxu0 0
          %913 = vmatpush1.bf16.msra.mxu0 %v881
          %914 = vmatprep.subr.bf16.mxu0 0
          %915 = vmatpush1.bf16.msra.mxu0 %v882
          %916 = vmatprep.subr.bf16.mxu0 0
          %917 = vmatpush1.bf16.msra.mxu0 0
          %918 = vmatprep.subr.bf16.mxu0 0
          %919 = vmatpush1.bf16.msra.mxu0 0
          %920 = vmatprep.subr.bf16.mxu0 0
          %921 = vmatpush1.bf16.msra.mxu0 0
          %922 = vmatprep.subr.bf16.mxu0 0
          %923 = vmatpush1.bf16.msra.mxu0 0
          %924 = vmatprep.subr.bf16.mxu0 0
          %925 = vmatpush1.bf16.msra.mxu0 0
          %926 = vmatprep.subr.bf16.mxu0 0
          %927 = vmatpush1.bf16.msra.mxu0 0
          %928 = vmatprep.subr.bf16.mxu0 0
          %929 = vmatpush1.bf16.msra.mxu0 0
          %930 = vmatprep.subr.bf16.mxu0 0
          %931 = vmatpush1.bf16.msra.mxu0 0
          %932 = vmatprep.subr.bf16.mxu0 0
          %933 = vmatpush1.bf16.msra.mxu0 0
          %934 = vmatprep.subr.bf16.mxu0 0
          %935 = vmatpush1.bf16.msra.mxu0 0
          %936 = vmatprep.subr.bf16.mxu0 0
          %937 = vmatpush1.bf16.msra.mxu0 0
          %938 = vmatprep.subr.bf16.mxu0 0
          %939 = vmatpush1.bf16.msra.mxu0 0
          %940 = vmatprep.mubr.bf16.mxu0 0
          %941 = vmatmul.mubr.bf16.gmra.mrb[0].mxu0 %v903
          %v942 = vpop.f32.mrb[0].mxu0
          %v943 = vadd.f32 0.0, %v942
          %v944 = vpop.f32.mrb[0].mxu0
          %v945 = vpop.f32.mrb[0].mxu0
          %v946 = vadd.f32 0.0, %v945
          %v947 = vpop.f32.mrb[0].mxu0
          %948 = vmatprep.mubr.bf16.mxu0 0
          %949 = vmatmul.mubr.bf16.gmra.mrb[0].mxu0 %v906
          %v950 = vpop.f32.mrb[0].mxu0
          %v951 = vadd.f32 0.0, %v950
          %v952 = vpop.f32.mrb[0].mxu0
          %v953 = vpop.f32.mrb[0].mxu0
          %v954 = vadd.f32 0.0, %v953
          %v955 = vpop.f32.mrb[0].mxu0
          %956 = vdwg.mxu0
          %958 = vset.pattern.permute.xlu0 0
          %959 = vperm.xlu0 %958, %v943
          %v960 = vpop.permute.xlu0 %959
          %963 = vset.pattern.permute.xlu0 0
          %964 = vperm.xlu0 %963, %v946
          %v965 = vpop.permute.xlu0 %964
          %968 = vset.pattern.permute.xlu0 0
          %969 = vperm.xlu0 %968, %v951
          %v970 = vpop.permute.xlu0 %969
          %973 = vset.pattern.permute.xlu0 0
          %974 = vperm.xlu0 %973, %v954
          %v975 = vpop.permute.xlu0 %974
          %v981 = vunpack.c.l.b16 %v883
          %v982 = vunpack.c.l.b16 %v884
          %v983 = vunpack.c.l.b16 %v885
          %v984 = vunpack.c.l.b16 %v886
          %v985 = vpack.c.b16 %v982, %v981
          %v986 = vpack.c.b16 %v984, %v983
          %v988 = vsel %vm701, %v985, 0
          %v991 = vsel %vm701, %v986, 0
          %993 = vmatprep.subr.bf16.mxu0 0
          %994 = vmatpush1.bf16.msra.mxu0 %v869
          %995 = vmatprep.subr.bf16.mxu0 0
          %996 = vmatpush1.bf16.msra.mxu0 %v870
          %997 = vmatprep.subr.bf16.mxu0 0
          %998 = vmatpush1.bf16.msra.mxu0 0
          %999 = vmatprep.subr.bf16.mxu0 0
          %1000 = vmatpush1.bf16.msra.mxu0 0
          %1001 = vmatprep.subr.bf16.mxu0 0
          %1002 = vmatpush1.bf16.msra.mxu0 0
          %1003 = vmatprep.subr.bf16.mxu0 0
          %1004 = vmatpush1.bf16.msra.mxu0 0
          %1005 = vmatprep.subr.bf16.mxu0 0
          %1006 = vmatpush1.bf16.msra.mxu0 0
          %1007 = vmatprep.subr.bf16.mxu0 0
          %1008 = vmatpush1.bf16.msra.mxu0 0
          %1009 = vmatprep.subr.bf16.mxu0 0
          %1010 = vmatpush1.bf16.msra.mxu0 0
          %1011 = vmatprep.subr.bf16.mxu0 0
          %1012 = vmatpush1.bf16.msra.mxu0 0
          %1013 = vmatprep.subr.bf16.mxu0 0
          %1014 = vmatpush1.bf16.msra.mxu0 0
          %1015 = vmatprep.subr.bf16.mxu0 0
          %1016 = vmatpush1.bf16.msra.mxu0 0
          %1017 = vmatprep.subr.bf16.mxu0 0
          %1018 = vmatpush1.bf16.msra.mxu0 0
          %1019 = vmatprep.subr.bf16.mxu0 0
          %1020 = vmatpush1.bf16.msra.mxu0 0
          %1021 = vmatprep.subr.bf16.mxu0 0
          %1022 = vmatpush1.bf16.msra.mxu0 0
          %1023 = vmatprep.subr.bf16.mxu0 0
          %1024 = vmatpush1.bf16.msra.mxu0 0
          %1025 = vmatprep.mubr.bf16.mxu0 0
          %1026 = vmatmul.mubr.bf16.gmra.mrb[0].mxu0 %v988
          %v1027 = vpop.f32.mrb[0].mxu0
          %v1028 = vadd.f32 %v960, %v1027
          %v1029 = vpop.f32.mrb[0].mxu0
          %v1030 = vpop.f32.mrb[0].mxu0
          %v1031 = vadd.f32 %v965, %v1030
          %v1032 = vpop.f32.mrb[0].mxu0
          %1033 = vmatprep.mubr.bf16.mxu0 0
          %1034 = vmatmul.mubr.bf16.gmra.mrb[0].mxu0 %v991
          %v1035 = vpop.f32.mrb[0].mxu0
          %v1036 = vadd.f32 %v970, %v1035
          %v1037 = vpop.f32.mrb[0].mxu0
          %v1038 = vpop.f32.mrb[0].mxu0
          %v1039 = vadd.f32 %v975, %v1038
          %v1040 = vpop.f32.mrb[0].mxu0
          %1041 = vdwg.mxu0
          %1043 = vset.pattern.permute.xlu0 0
          %1044 = vperm.xlu0 %1043, %v372
          %v1045 = vpop.permute.xlu0 %1044
          %1048 = vset.pattern.permute.xlu0 0
          %1049 = vperm.xlu0 %1048, %v373
          %v1050 = vpop.permute.xlu0 %1049
          %1053 = vset.pattern.permute.xlu0 0
          %1054 = vperm.xlu0 %1053, %v374
          %v1055 = vpop.permute.xlu0 %1054
          %1058 = vset.pattern.permute.xlu0 0
          %1059 = vperm.xlu0 %1058, %v375
          %v1060 = vpop.permute.xlu0 %1059
          %v1062 = vadd.f32 %v1028, %v1045
          %v1063 = vadd.f32 %v1031, %v1050
          %v1064 = vadd.f32 %v1036, %v1055
          %v1065 = vadd.f32 %v1039, %v1060
          %v1066 = vmax.f32 %v1062, 0.0
          %v1067 = vmax.f32 %v1063, 0.0
          %v1068 = vmax.f32 %v1064, 0.0
          %v1069 = vmax.f32 %v1065, 0.0
          %v1070 = vpack.c.bf16 %v1067, %v1066
          %v1071 = vpack.c.bf16 %v1069, %v1068
          %v1072 = vld [vmem:[%s6] sm:$0xf]
          %v1073 = vld [vmem:[%s6 + $0x4] sm:$0xf]
          %1075 = vset.pattern.permute.xlu0 0
          %1076 = vperm.xlu0 %1075, %v376
          %v1077 = vpop.permute.xlu0 %1076
          %1080 = vset.pattern.permute.xlu0 0
          %1081 = vperm.xlu0 %1080, %v377
          %v1082 = vpop.permute.xlu0 %1081
          %v1086 = vunpack.c.l.b16 %v1072
          %v1087 = vunpack.c.l.b16 %v1073
          %v1088 = vpack.c.b16 %v1087, %v1086
          %v1090 = vsel %vm701, %v1088, 0
          %1092 = vmatprep.subr.bf16.mxu0 0
          %1093 = vmatpush1.bf16.msra.mxu0 %v1070
          %1094 = vmatprep.subr.bf16.mxu0 0
          %1095 = vmatpush1.bf16.msra.mxu0 %v1071
          %1096 = vmatprep.subr.bf16.mxu0 0
          %1097 = vmatpush1.bf16.msra.mxu0 0
          %1098 = vmatprep.subr.bf16.mxu0 0
          %1099 = vmatpush1.bf16.msra.mxu0 0
          %1100 = vmatprep.subr.bf16.mxu0 0
          %1101 = vmatpush1.bf16.msra.mxu0 0
          %1102 = vmatprep.subr.bf16.mxu0 0
          %1103 = vmatpush1.bf16.msra.mxu0 0
          %1104 = vmatprep.subr.bf16.mxu0 0
          %1105 = vmatpush1.bf16.msra.mxu0 0
          %1106 = vmatprep.subr.bf16.mxu0 0
          %1107 = vmatpush1.bf16.msra.mxu0 0
          %1108 = vmatprep.subr.bf16.mxu0 0
          %1109 = vmatpush1.bf16.msra.mxu0 0
          %1110 = vmatprep.subr.bf16.mxu0 0
          %1111 = vmatpush1.bf16.msra.mxu0 0
          %1112 = vmatprep.subr.bf16.mxu0 0
          %1113 = vmatpush1.bf16.msra.mxu0 0
          %1114 = vmatprep.subr.bf16.mxu0 0
          %1115 = vmatpush1.bf16.msra.mxu0 0
          %1116 = vmatprep.subr.bf16.mxu0 0
          %1117 = vmatpush1.bf16.msra.mxu0 0
          %1118 = vmatprep.subr.bf16.mxu0 0
          %1119 = vmatpush1.bf16.msra.mxu0 0
          %1120 = vmatprep.subr.bf16.mxu0 0
          %1121 = vmatpush1.bf16.msra.mxu0 0
          %1122 = vmatprep.subr.bf16.mxu0 0
          %1123 = vmatpush1.bf16.msra.mxu0 0
          %1124 = vmatprep.mubr.bf16.mxu0 0
          %1125 = vmatmul.mubr.bf16.gmra.mrb[0].mxu0 %v1090
          %v1126 = vpop.f32.mrb[0].mxu0
          %v1127 = vadd.f32 %v1077, %v1126
          %v1128 = vpop.f32.mrb[0].mxu0
          %v1129 = vpop.f32.mrb[0].mxu0
          %v1130 = vadd.f32 %v1082, %v1129
          %v1131 = vpop.f32.mrb[0].mxu0
          %1132 = vdwg.mxu0
          %v1133 = vmax.f32 %v1127, 0.0
          %v1134 = vmax.f32 %v1130, 0.0
          %v1135 = vpack.c.bf16 %v1134, %v1133
          %v1136 = vld [vmem:[%s7] sm:$0xf]
          %1138 = vset.pattern.permute.xlu0 0
          %1139 = vperm.xlu0 %1138, %v378
          %v1140 = vpop.permute.xlu0 %1139
          %v1143 = vsel %vm417, %v1136, 0
          %1145 = vmatprep.subr.bf16.mxu0 0
          %1146 = vmatpush1.bf16.msra.mxu0 %v1135
          %1147 = vmatprep.subr.bf16.mxu0 0
          %1148 = vmatpush1.bf16.msra.mxu0 0
          %1149 = vmatprep.subr.bf16.mxu0 0
          %1150 = vmatpush1.bf16.msra.mxu0 0
          %1151 = vmatprep.subr.bf16.mxu0 0
          %1152 = vmatpush1.bf16.msra.mxu0 0
          %1153 = vmatprep.subr.bf16.mxu0 0
          %1154 = vmatpush1.bf16.msra.mxu0 0
          %1155 = vmatprep.subr.bf16.mxu0 0
          %1156 = vmatpush1.bf16.msra.mxu0 0
          %1157 = vmatprep.subr.bf16.mxu0 0
          %1158 = vmatpush1.bf16.msra.mxu0 0
          %1159 = vmatprep.subr.bf16.mxu0 0
          %1160 = vmatpush1.bf16.msra.mxu0 0
          %1161 = vmatprep.subr.bf16.mxu0 0
          %1162 = vmatpush1.bf16.msra.mxu0 0
          %1163 = vmatprep.subr.bf16.mxu0 0
          %1164 = vmatpush1.bf16.msra.mxu0 0
          %1165 = vmatprep.subr.bf16.mxu0 0
          %1166 = vmatpush1.bf16.msra.mxu0 0
          %1167 = vmatprep.subr.bf16.mxu0 0
          %1168 = vmatpush1.bf16.msra.mxu0 0
          %1169 = vmatprep.subr.bf16.mxu0 0
          %1170 = vmatpush1.bf16.msra.mxu0 0
          %1171 = vmatprep.subr.bf16.mxu0 0
          %1172 = vmatpush1.bf16.msra.mxu0 0
          %1173 = vmatprep.subr.bf16.mxu0 0
          %1174 = vmatpush1.bf16.msra.mxu0 0
          %1175 = vmatprep.subr.bf16.mxu0 0
          %1176 = vmatpush1.bf16.msra.mxu0 0
          %1177 = vmatprep.mubr.bf16.mxu0 0
          %1178 = vmatmul.mubr.bf16.gmra.mrb[0].mxu0 %v1143
          %v1179 = vpop.f32.mrb[0].mxu0
          %v1180 = vadd.f32 %v1140, %v1179
          %v1181 = vpop.f32.mrb[0].mxu0
          %v1182 = vpop.f32.mrb[0].mxu0
          %v1183 = vpop.f32.mrb[0].mxu0
          %1184 = vdwg.mxu0
          %1185 = vst.msk [vmem:[%s347] sm:$0xff] %vm795, %v1180
        $region64: #{tpu_custom_call.1} parent=55 // pred_fallthru
          _
        %s1186 = sand.u32 %s239, 1
        %s1187 = scalar_lea.sflag [#allocation5], %s1186
        %s1188 = sand.u32 %s239, 1
        %s1189 = smul.addr %s1188, 8
        %s1190 = scalar_lea.vmem [#allocation4], %s1189
        // Predicated region
        $region65: #{tpu_custom_call.1} parent=55 // pred_check
          %p1191 = pneg %p249
        $region66: #{tpu_custom_call.1} parent=55 // pred_check_branch
          %1193 = sbr.rel (%p1191) target = $region68
        $region67: #{tpu_custom_call.1} parent=55 // pred_region
          %s1195 = ssub.s32 128, 128
          %1196 = vsyncadd %s1187, %s1195
          %s1197 = smul.addr %s27, 128
          %s1198 = scalar_lea.hbm %s9, %s1197
          %s1200 = sshll.u32 %s1190, 4
          %s1201 = int_to_ptr.vmem [resolvable:$true] %s1200
          %1203 = dma.vmem_to_hbm [thread:$0]  %s1201, 128, %s1198, %s1187
        $region68: #{tpu_custom_call.1} parent=55 // pred_fallthru
          _
      $region56: #{tpu_custom_call.1} parent=5 // pred_fallthru
        _
      %p1204 = scmp.le.s32.totalorder 2, %s18
      // Predicated region
      $region69: #{tpu_custom_call.1} parent=5 // pred_check
        %p1205 = pneg %p1204
      $region70: #{tpu_custom_call.1} parent=5 // pred_check_branch
        %1207 = sbr.rel (%p1205) target = $region72
      $region71: #{tpu_custom_call.1} parent=5 // pred_region
        %s1208 = ssub.s32 %s18, 2
        // Predicated region
        $region73: #{tpu_custom_call.1} parent=71 // pred_check
          %p1209 = pneg %p255
        $region74: #{tpu_custom_call.1} parent=71 // pred_check_branch
          %1211 = sbr.rel (%p1209) target = $region76
        $region75: #{tpu_custom_call.1} parent=71 // pred_region
          %s1212 = sand.u32 %s240, 1
          %s1213 = scalar_lea.sflag [#allocation5], %s1212
          %s1214 = sand.u32 %s240, 1
          %s1215 = smul.addr %s1214, 8
          %s1216 = scalar_lea.vmem [#allocation4], %s1215
          %1217 = dma.done %s1213, 128
        $region76: #{tpu_custom_call.1} parent=71 // pred_fallthru
          _
      $region72: #{tpu_custom_call.1} parent=5 // pred_fallthru
        _
    $region6: #{tpu_custom_call.1} parent=1 // loop_footer
      %s22 = sadd.s32 1, %s18
    $region7: #{tpu_custom_call.1} parent=1 // loop_footer_branch
      %17 = sbr.rel target = $region3
    $region8: #{tpu_custom_call.1} parent=1 // loop_exit
      _
    %1218 = vsyncpa [#allocation5], 1
    %s1219 = scalar_lea.sflag [#allocation5], 1
    %1220 = vsyncpa %s1219, 1

// kernel: tpu_custom_call.1
$region0: #{tpu_custom_call.1}
  #allocation0 [shape = 'u32[]', space=smem, size = 0x4, offset = 0x4, fixed_abs, tag = 'smem constant byte address 0x4 - core index']
  #allocation1 [shape = 'u32[144,128]{1,0:T(1,128)}', space=vmem, size = 0x12000, scoped, tag = 'internal scratch']
  #allocation2 [shape = 'f32[64,1]{1,0:T(8,128)}', space=vmem, size = 0x8000, scoped, tag = 'scratch operand']
  #allocation3 [shape = 'f32[2,32,4]{2,1,0:T(8,128)}', space=vmem, size = 0x8000, scoped, tag = 'scratch operand']
  %s0 = inlined_call_operand.vmem [shape: bf16[2,2,16,8], index: 0, kind: input, shape index: {}]
  %s1 = inlined_call_operand.vmem [shape: bf16[16,16], index: 1, kind: input, shape index: {}]
  %s2 = inlined_call_operand.vmem [shape: bf16[32,16], index: 2, kind: input, shape index: {}]
  %s3 = inlined_call_operand.vmem [shape: bf16[64,32], index: 3, kind: input, shape index: {}]
  %s4 = inlined_call_operand.vmem [shape: bf16[32,32], index: 4, kind: input, shape index: {}]
  %s5 = inlined_call_operand.vmem [shape: bf16[32,64], index: 5, kind: input, shape index: {}]
  %s6 = inlined_call_operand.vmem [shape: bf16[16,32], index: 6, kind: input, shape index: {}]
  %s7 = inlined_call_operand.vmem [shape: bf16[8,16], index: 7, kind: input, shape index: {}]
  %s8 = inlined_call_operand.vmem [shape: f32[168,1], index: 8, kind: input, shape index: {}]
  %s9 = inlined_call_operand.hbm [shape: f32[2,8,8], index: 9, kind: output, shape index: {}]
  %s10 = sld [smem:[#allocation0]]
  $region77: #{tpu_custom_call.1} parent=0
    _
  %s12 = ssub.s32 1, %s10
  %s13 = scalar_select 0, %s12, %s10
  $region1: #{tpu_custom_call.1} parent=0
    #allocation4 [shape = 'u8[8192]{0}', space=vmem, size = 0x2000, scoped, tag = 'output window, operand 0']
    #allocation5 [shape = 's32[2]{0}', space=sflag, size = 0x8, scoped, tag = 'scoped memory for tpu_custom_call.1']
    %14 = vsyncpa [#allocation5], 0
    %s15 = scalar_lea.sflag [#allocation5], 1
    %16 = vsyncpa %s15, 0
    loop: start=0, step=1, limit=6
    $region2: #{tpu_custom_call.1} parent=1 // loop_pre_header
      _
    $region3: #{tpu_custom_call.1} parent=1 // loop_header
      %s18 = sphi 0, %s22
      %p19 = scmp.ge.s32.totalorder %s18, 6
      %s25 = sphi 0, %s37
      %s26 = sphi 0, %s33
      %s27 = sphi 0, %s25
      %s28 = sphi 0, %s26
      %s29 = sphi 0, %s27
      %s30 = sphi 0, %s28
      %s42 = sphi 0, %s44
      %s45 = sphi 0, %s42
      %s46 = sphi 0, %s45
      %s62 = sphi 0, %s46
      %s66 = sphi 0, %s66
      %s68 = sphi 0, %s66
      %s69 = sphi 0, %s68
      %s83 = sphi 0, %s69
      %s87 = sphi 0, %s87
      %s89 = sphi 0, %s87
      %s90 = sphi 0, %s89
      %s104 = sphi 0, %s90
      %s108 = sphi 0, %s108
      %s110 = sphi 0, %s108
      %s111 = sphi 0, %s110
      %s125 = sphi 0, %s111
      %s129 = sphi 0, %s129
      %s131 = sphi 0, %s129
      %s132 = sphi 0, %s131
      %s146 = sphi 0, %s132
      %s150 = sphi 0, %s150
      %s152 = sphi 0, %s150
      %s153 = sphi 0, %s152
      %s167 = sphi 0, %s153
      %s171 = sphi 0, %s171
      %s173 = sphi 0, %s171
      %s174 = sphi 0, %s173
      %s188 = sphi 0, %s174
      %s192 = sphi 0, %s192
      %s194 = sphi 0, %s192
      %s195 = sphi 0, %s194
      %s209 = sphi 0, %s195
      %s213 = sphi 0, %s213
      %s215 = sphi 0, %s213
      %s216 = sphi 0, %s215
      %s230 = sphi 0, %s216
      %s236 = sphi 0, %s238
      %s239 = sphi 0, %s236
      %s240 = sphi 0, %s239
      %s256 = sphi 0, %s240
    $region4: #{tpu_custom_call.1} parent=1 // loop_header_branch
      %21 = sbr.rel (%p19) target = $region8
    $region5: #{tpu_custom_call.1} parent=1 // loop_body
      %s23 = ssub.s32 %s18, 1
      %s24 = ssub.s32 %s18, 2
      %s31 = sadd.s32 1, %s26
      %p32 = scmp.ge.s32.totalorder %s31, 2
      %s33 = scalar_select %p32, 0, %s31
      %s34 = sadd.s32 1, %s25
      %s35 = scalar_select %p32, %s34, %s25
      %p36 = scmp.ge.s32.totalorder %s35, 2
      %s37 = scalar_select %p36, 0, %s35
      %s38 = ssub.s32 %s25, %s37
      %s39 = ssub.s32 %s26, %s33
      %s40 = sor.u32 %s38, %s39
      %p41 = scmp.eq.s32.totalorder %s40, 0
      %s43 = sadd.s32 %s42, 1
      %s44 = scalar_select %p41, %s42, %s43
      %p47 = pneg %p41
      %p48 = scmp.eq.s32.totalorder %s18, 3
      %p49 = por %p47, %p48
      %p50 = scmp.ne.s32.totalorder %s42, %s45
      %p51 = scmp.eq.s32.totalorder %s18, 0
      %p52 = por %p50, %p51
      %p53 = scmp.ne.s32.totalorder %s42, %s45
      %p54 = scmp.eq.s32.totalorder %s23, 3
      %p55 = por %p53, %p54
      %p56 = scmp.ne.s32.totalorder %s45, %s46
      %p57 = scmp.eq.s32.totalorder %s23, 0
      %p58 = por %p56, %p57
      %p59 = scmp.ne.s32.totalorder %s45, %s46
      %p60 = scmp.eq.s32.totalorder %s24, 3
      %p61 = por %p59, %p60
      %p63 = scmp.ne.s32.totalorder %s46, %s62
      %p64 = scmp.eq.s32.totalorder %s24, 0
      %p65 = por %p63, %p64
      %s67 = sadd.s32 %s66, 1
      %p70 = scmp.eq.s32.totalorder %s18, 3
      %p71 = scmp.ne.s32.totalorder %s66, %s68
      %p72 = scmp.eq.s32.totalorder %s18, 0
      %p73 = por %p71, %p72
      %p74 = scmp.ne.s32.totalorder %s66, %s68
      %p75 = scmp.eq.s32.totalorder %s23, 3
      %p76 = por %p74, %p75
      %p77 = scmp.ne.s32.totalorder %s68, %s69
      %p78 = scmp.eq.s32.totalorder %s23, 0
      %p79 = por %p77, %p78
      %p80 = scmp.ne.s32.totalorder %s68, %s69
      %p81 = scmp.eq.s32.totalorder %s24, 3
      %p82 = por %p80, %p81
      %p84 = scmp.ne.s32.totalorder %s69, %s83
      %p85 = scmp.eq.s32.totalorder %s24, 0
      %p86 = por %p84, %p85
      %s88 = sadd.s32 %s87, 1
      %p91 = scmp.eq.s32.totalorder %s18, 3
      %p92 = scmp.ne.s32.totalorder %s87, %s89
      %p93 = scmp.eq.s32.totalorder %s18, 0
      %p94 = por %p92, %p93
      %p95 = scmp.ne.s32.totalorder %s87, %s89
      %p96 = scmp.eq.s32.totalorder %s23, 3
      %p97 = por %p95, %p96
      %p98 = scmp.ne.s32.totalorder %s89, %s90
      %p99 = scmp.eq.s32.totalorder %s23, 0
      %p100 = por %p98, %p99
      %p101 = scmp.ne.s32.totalorder %s89, %s90
      %p102 = scmp.eq.s32.totalorder %s24, 3
      %p103 = por %p101, %p102
      %p105 = scmp.ne.s32.totalorder %s90, %s104
      %p106 = scmp.eq.s32.totalorder %s24, 0
      %p107 = por %p105, %p106
      %s109 = sadd.s32 %s108, 1
      %p112 = scmp.eq.s32.totalorder %s18, 3
      %p113 = scmp.ne.s32.totalorder %s108, %s110
      %p114 = scmp.eq.s32.totalorder %s18, 0
      %p115 = por %p113, %p114
      %p116 = scmp.ne.s32.totalorder %s108, %s110
      %p117 = scmp.eq.s32.totalorder %s23, 3
      %p118 = por %p116, %p117
      %p119 = scmp.ne.s32.totalorder %s110, %s111
      %p120 = scmp.eq.s32.totalorder %s23, 0
      %p121 = por %p119, %p120
      %p122 = scmp.ne.s32.totalorder %s110, %s111
      %p123 = scmp.eq.s32.totalorder %s24, 3
      %p124 = por %p122, %p123
      %p126 = scmp.ne.s32.totalorder %s111, %s125
      %p127 = scmp.eq.s32.totalorder %s24, 0
      %p128 = por %p126, %p127
      %s130 = sadd.s32 %s129, 1
      %p133 = scmp.eq.s32.totalorder %s18, 3
      %p134 = scmp.ne.s32.totalorder %s129, %s131
      %p135 = scmp.eq.s32.totalorder %s18, 0
      %p136 = por %p134, %p135
      %p137 = scmp.ne.s32.totalorder %s129, %s131
      %p138 = scmp.eq.s32.totalorder %s23, 3
      %p139 = por %p137, %p138
      %p140 = scmp.ne.s32.totalorder %s131, %s132
      %p141 = scmp.eq.s32.totalorder %s23, 0
      %p142 = por %p140, %p141
      %p143 = scmp.ne.s32.totalorder %s131, %s132
      %p144 = scmp.eq.s32.totalorder %s24, 3
      %p145 = por %p143, %p144
      %p147 = scmp.ne.s32.totalorder %s132, %s146
      %p148 = scmp.eq.s32.totalorder %s24, 0
      %p149 = por %p147, %p148
      %s151 = sadd.s32 %s150, 1
      %p154 = scmp.eq.s32.totalorder %s18, 3
      %p155 = scmp.ne.s32.totalorder %s150, %s152
      %p156 = scmp.eq.s32.totalorder %s18, 0
      %p157 = por %p155, %p156
      %p158 = scmp.ne.s32.totalorder %s150, %s152
      %p159 = scmp.eq.s32.totalorder %s23, 3
      %p160 = por %p158, %p159
      %p161 = scmp.ne.s32.totalorder %s152, %s153
      %p162 = scmp.eq.s32.totalorder %s23, 0
      %p163 = por %p161, %p162
      %p164 = scmp.ne.s32.totalorder %s152, %s153
      %p165 = scmp.eq.s32.totalorder %s24, 3
      %p166 = por %p164, %p165
      %p168 = scmp.ne.s32.totalorder %s153, %s167
      %p169 = scmp.eq.s32.totalorder %s24, 0
      %p170 = por %p168, %p169
      %s172 = sadd.s32 %s171, 1
      %p175 = scmp.eq.s32.totalorder %s18, 3
      %p176 = scmp.ne.s32.totalorder %s171, %s173
      %p177 = scmp.eq.s32.totalorder %s18, 0
      %p178 = por %p176, %p177
      %p179 = scmp.ne.s32.totalorder %s171, %s173
      %p180 = scmp.eq.s32.totalorder %s23, 3
      %p181 = por %p179, %p180
      %p182 = scmp.ne.s32.totalorder %s173, %s174
      %p183 = scmp.eq.s32.totalorder %s23, 0
      %p184 = por %p182, %p183
      %p185 = scmp.ne.s32.totalorder %s173, %s174
      %p186 = scmp.eq.s32.totalorder %s24, 3
      %p187 = por %p185, %p186
      %p189 = scmp.ne.s32.totalorder %s174, %s188
      %p190 = scmp.eq.s32.totalorder %s24, 0
      %p191 = por %p189, %p190
      %s193 = sadd.s32 %s192, 1
      %p196 = scmp.eq.s32.totalorder %s18, 3
      %p197 = scmp.ne.s32.totalorder %s192, %s194
      %p198 = scmp.eq.s32.totalorder %s18, 0
      %p199 = por %p197, %p198
      %p200 = scmp.ne.s32.totalorder %s192, %s194
      %p201 = scmp.eq.s32.totalorder %s23, 3
      %p202 = por %p200, %p201
      %p203 = scmp.ne.s32.totalorder %s194, %s195
      %p204 = scmp.eq.s32.totalorder %s23, 0
      %p205 = por %p203, %p204
      %p206 = scmp.ne.s32.totalorder %s194, %s195
      %p207 = scmp.eq.s32.totalorder %s24, 3
      %p208 = por %p206, %p207
      %p210 = scmp.ne.s32.totalorder %s195, %s209
      %p211 = scmp.eq.s32.totalorder %s24, 0
      %p212 = por %p210, %p211
      %s214 = sadd.s32 %s213, 1
      %p217 = scmp.eq.s32.totalorder %s18, 3
      %p218 = scmp.ne.s32.totalorder %s213, %s215
      %p219 = scmp.eq.s32.totalorder %s18, 0
      %p220 = por %p218, %p219
      %p221 = scmp.ne.s32.totalorder %s213, %s215
      %p222 = scmp.eq.s32.totalorder %s23, 3
      %p223 = por %p221, %p222
      %p224 = scmp.ne.s32.totalorder %s215, %s216
      %p225 = scmp.eq.s32.totalorder %s23, 0
      %p226 = por %p224, %p225
      %p227 = scmp.ne.s32.totalorder %s215, %s216
      %p228 = scmp.eq.s32.totalorder %s24, 3
      %p229 = por %p227, %p228
      %p231 = scmp.ne.s32.totalorder %s216, %s230
      %p232 = scmp.eq.s32.totalorder %s24, 0
      %p233 = por %p231, %p232
      %s234 = ssub.s32 %s25, %s37
      %p235 = scmp.eq.s32.totalorder %s234, 0
      %s237 = sadd.s32 %s236, 1
      %s238 = scalar_select %p235, %s236, %s237
      %p241 = pneg %p235
      %p242 = scmp.eq.s32.totalorder %s18, 3
      %p243 = por %p241, %p242
      %p244 = scmp.ne.s32.totalorder %s236, %s239
      %p245 = scmp.eq.s32.totalorder %s18, 0
      %p246 = por %p244, %p245
      %p247 = scmp.ne.s32.totalorder %s236, %s239
      %p248 = scmp.eq.s32.totalorder %s23, 3
      %p249 = por %p247, %p248
      %p250 = scmp.ne.s32.totalorder %s239, %s240
      %p251 = scmp.eq.s32.totalorder %s23, 0
      %p252 = por %p250, %p251
      %p253 = scmp.ne.s32.totalorder %s239, %s240
      %p254 = scmp.eq.s32.totalorder %s24, 3
      %p255 = por %p253, %p254
      %p257 = scmp.ne.s32.totalorder %s240, %s256
      %p258 = scmp.eq.s32.totalorder %s24, 0
      %p259 = por %p257, %p258
      %p260 = scmp.le.s32.totalorder 1, %s18
      %p261 = scmp.lt.s32.totalorder %s18, 5
      %p262 = pnand %p260, %p261
      %p263 = pneg %p262
      // Predicated region
      $region9: #{tpu_custom_call.1} parent=5 // pred_check
        _
      $region10: #{tpu_custom_call.1} parent=5 // pred_check_branch
        %265 = sbr.rel (%p262) target = $region12
      $region11: #{tpu_custom_call.1} parent=5 // pred_region
        %s266 = ssub.s32 %s18, 1
        // Predicated region
        $region13: #{tpu_custom_call.1} parent=11 // pred_check
          %p267 = pneg %p79
        $region14: #{tpu_custom_call.1} parent=11 // pred_check_branch
          %269 = sbr.rel (%p267) target = $region16
        $region15: #{tpu_custom_call.1} parent=11 // pred_region
          _
        $region16: #{tpu_custom_call.1} parent=11 // pred_fallthru
          _
        // Predicated region
        $region17: #{tpu_custom_call.1} parent=11 // pred_check
          %p270 = pneg %p100
        $region18: #{tpu_custom_call.1} parent=11 // pred_check_branch
          %272 = sbr.rel (%p270) target = $region20
        $region19: #{tpu_custom_call.1} parent=11 // pred_region
          _
        $region20: #{tpu_custom_call.1} parent=11 // pred_fallthru
          _
        // Predicated region
        $region21: #{tpu_custom_call.1} parent=11 // pred_check
          %p273 = pneg %p121
        $region22: #{tpu_custom_call.1} parent=11 // pred_check_branch
          %275 = sbr.rel (%p273) target = $region24
        $region23: #{tpu_custom_call.1} parent=11 // pred_region
          _
        $region24: #{tpu_custom_call.1} parent=11 // pred_fallthru
          _
        // Predicated region
        $region25: #{tpu_custom_call.1} parent=11 // pred_check
          %p276 = pneg %p142
        $region26: #{tpu_custom_call.1} parent=11 // pred_check_branch
          %278 = sbr.rel (%p276) target = $region28
        $region27: #{tpu_custom_call.1} parent=11 // pred_region
          _
        $region28: #{tpu_custom_call.1} parent=11 // pred_fallthru
          _
        // Predicated region
        $region29: #{tpu_custom_call.1} parent=11 // pred_check
          %p279 = pneg %p163
        $region30: #{tpu_custom_call.1} parent=11 // pred_check_branch
          %281 = sbr.rel (%p279) target = $region32
        $region31: #{tpu_custom_call.1} parent=11 // pred_region
          _
        $region32: #{tpu_custom_call.1} parent=11 // pred_fallthru
          _
        // Predicated region
        $region33: #{tpu_custom_call.1} parent=11 // pred_check
          %p282 = pneg %p184
        $region34: #{tpu_custom_call.1} parent=11 // pred_check_branch
          %284 = sbr.rel (%p282) target = $region36
        $region35: #{tpu_custom_call.1} parent=11 // pred_region
          _
        $region36: #{tpu_custom_call.1} parent=11 // pred_fallthru
          _
        // Predicated region
        $region37: #{tpu_custom_call.1} parent=11 // pred_check
          %p285 = pneg %p205
        $region38: #{tpu_custom_call.1} parent=11 // pred_check_branch
          %287 = sbr.rel (%p285) target = $region40
        $region39: #{tpu_custom_call.1} parent=11 // pred_region
          _
        $region40: #{tpu_custom_call.1} parent=11 // pred_fallthru
          _
        // Predicated region
        $region41: #{tpu_custom_call.1} parent=11 // pred_check
          %p288 = pneg %p226
        $region42: #{tpu_custom_call.1} parent=11 // pred_check_branch
          %290 = sbr.rel (%p288) target = $region44
        $region43: #{tpu_custom_call.1} parent=11 // pred_region
          _
        $region44: #{tpu_custom_call.1} parent=11 // pred_fallthru
          _
      $region12: #{tpu_custom_call.1} parent=5 // pred_fallthru
        _
      %p291 = scmp.lt.s32.totalorder %s18, 4
      // Predicated region
      $region45: #{tpu_custom_call.1} parent=5 // pred_check
        %p292 = pneg %p291
      $region46: #{tpu_custom_call.1} parent=5 // pred_check_branch
        %294 = sbr.rel (%p292) target = $region48
      $region47: #{tpu_custom_call.1} parent=5 // pred_region
        // Predicated region
        $region49: #{tpu_custom_call.1} parent=47 // pred_check
          %p295 = pneg %p52
        $region50: #{tpu_custom_call.1} parent=47 // pred_check_branch
          %297 = sbr.rel (%p295) target = $region52
        $region51: #{tpu_custom_call.1} parent=47 // pred_region
          %p298 = scmp.lt.s32.totalorder %s25, 1
          %s299 = scalar_select %p298, %s25, 1
          %p300 = scmp.lt.s32.totalorder %s26, 1
          %s301 = scalar_select %p300, %s26, 1
          %s302 = smul.addr %s301, 2
          %s303 = smul.addr %s299, 4
          %s304 = sadd.s32 %s302, %s303
          %s305 = smul.addr %s304, 4
          %s306 = scalar_lea.vmem %s0, %s305
        $region52: #{tpu_custom_call.1} parent=47 // pred_fallthru
          _
      $region48: #{tpu_custom_call.1} parent=5 // pred_fallthru
        _
      %p307 = scmp.le.s32.totalorder 1, %s18
      %p308 = scmp.lt.s32.totalorder %s18, 5
      %p309 = pnand %p307, %p308
      %p310 = pneg %p309
      // Predicated region
      $region53: #{tpu_custom_call.1} parent=5 // pred_check
        _
      $region54: #{tpu_custom_call.1} parent=5 // pred_check_branch
        %312 = sbr.rel (%p309) target = $region56
      $region55: #{tpu_custom_call.1} parent=5 // pred_region
        %s313 = ssub.s32 %s18, 1
        %p314 = scmp.lt.s32.totalorder %s27, 1
        %s315 = scalar_select %p314, %s27, 1
        %p316 = scmp.lt.s32.totalorder %s28, 1
        %s317 = scalar_select %p316, %s28, 1
        %s318 = smul.addr %s317, 2
        %s319 = smul.addr %s315, 4
        %s320 = sadd.s32 %s318, %s319
        %s321 = smul.addr %s320, 4
        %s322 = scalar_lea.vmem %s0, %s321
        %p323 = pneg %p58
        %p324 = pneg %p55
        %p325 = pneg %p79
        %p326 = pneg %p76
        %p327 = pneg %p100
        %p328 = pneg %p97
        %p329 = pneg %p121
        %p330 = pneg %p118
        %p331 = pneg %p142
        %p332 = pneg %p139
        %p333 = pneg %p163
        %p334 = pneg %p160
        %p335 = pneg %p184
        %p336 = pneg %p181
        %p337 = pneg %p205
        %p338 = pneg %p202
        %p339 = pneg %p226
        %p340 = pneg %p223
        %p341 = pneg %p252
        %p342 = pneg %p249
        %s343 = sand.u32 %s239, 1
        %s344 = scalar_lea.sflag [#allocation5], %s343
        %s345 = sand.u32 %s239, 1
        %s346 = smul.addr %s345, 8
        %s347 = scalar_lea.vmem [#allocation4], %s346
        %p348 = scmp.lt.s32.totalorder %s27, 1
        %s349 = scalar_select %p348, %s27, 1
        %p350 = scmp.lt.s32.totalorder %s28, 1
        %s351 = scalar_select %p350, %s28, 1
        %s352 = smul.addr %s351, 2
        %s353 = smul.addr %s349, 4
        %s354 = sadd.s32 %s352, %s353
        %s355 = smul.addr %s354, 4
        %s356 = scalar_lea.vmem %s0, %s355
        %v358 = vld [vmem:[%s8] sm:$0xff]
        %v359 = vld [vmem:[%s8 + $0x8] sm:$0xff]
        %v360 = vld [vmem:[%s8 + $0x10] sm:$0xff]
        %v361 = vld [vmem:[%s8 + $0x18] sm:$0xff]
        %v362 = vld [vmem:[%s8 + $0x20] sm:$0xff]
        %v363 = vld [vmem:[%s8 + $0x28] sm:$0xff]
        %v364 = vld [vmem:[%s8 + $0x30] sm:$0xff]
        %v365 = vld [vmem:[%s8 + $0x38] sm:$0xff]
        %v366 = vld [vmem:[%s8 + $0x40] sm:$0xff]
        %v367 = vld [vmem:[%s8 + $0x48] sm:$0xff]
        %v368 = vld [vmem:[%s8 + $0x50] sm:$0xff]
        %v369 = vld [vmem:[%s8 + $0x58] sm:$0xff]
        %v370 = vld [vmem:[%s8 + $0x60] sm:$0xff]
        %v371 = vld [vmem:[%s8 + $0x68] sm:$0xff]
        %v372 = vld [vmem:[%s8 + $0x70] sm:$0xff]
        %v373 = vld [vmem:[%s8 + $0x78] sm:$0xff]
        %v374 = vld [vmem:[%s8 + $0x80] sm:$0xff]
        %v375 = vld [vmem:[%s8 + $0x88] sm:$0xff]
        %v376 = vld [vmem:[%s8 + $0x90] sm:$0xff]
        %v377 = vld [vmem:[%s8 + $0x98] sm:$0xff]
        %v378 = vld [vmem:[%s8 + $0xa0] sm:$0xff]
        %p379 = scmp.eq.s32.totalorder %s28, 0
        // Predicated region
        $region57: #{tpu_custom_call.1} parent=55 // pred_check
          %p380 = pneg %p379
        $region58: #{tpu_custom_call.1} parent=55 // pred_check_branch
          %382 = sbr.rel (%p380) target = $region60
        $region59: #{tpu_custom_call.1} parent=55 // pred_region
          %vm383 = vcmask 7168
          %384 = vst.msk [vmem:[#allocation2] sm:$0xff] %vm383, -inf
          %385 = vst.msk [vmem:[#allocation2 + $0x8] sm:$0xff] %vm383, -inf
          %386 = vst.msk [vmem:[#allocation2 + $0x10] sm:$0xff] %vm383, -inf
          %387 = vst.msk [vmem:[#allocation2 + $0x18] sm:$0xff] %vm383, -inf
          %388 = vst.msk [vmem:[#allocation2 + $0x20] sm:$0xff] %vm383, -inf
          %389 = vst.msk [vmem:[#allocation2 + $0x28] sm:$0xff] %vm383, -inf
          %390 = vst.msk [vmem:[#allocation2 + $0x30] sm:$0xff] %vm383, -inf
          %391 = vst.msk [vmem:[#allocation2 + $0x38] sm:$0xff] %vm383, -inf
        $region60: #{tpu_custom_call.1} parent=55 // pred_fallthru
          _
        %v392 = vld [vmem:[%s356] sm:$0xf]
        %v393 = vld [vmem:[%s356 + $0x4] sm:$0xf]
        %v394 = vld [vmem:[%s1] sm:$0xf]
        %v395 = vld [vmem:[%s1 + $0x4] sm:$0xf]
        %397 = vset.pattern.permute.xlu0 0
        %398 = vperm.xlu0 %397, %v358
        %v399 = vpop.permute.xlu0 %398
        %402 = vset.pattern.permute.xlu0 0
        %403 = vperm.xlu0 %402, %v359
        %v404 = vpop.permute.xlu0 %403
        %v408 = vunpack.c.l.b16 %v394
        %v409 = vunpack.c.l.b16 %v395
        %v410 = vpack.c.b16 %v409, %v408
        %v413 = vunpack.c.l.b16 %v392
        %v414 = vunpack.c.l.b16 %v393
        %v415 = vpack.c.b16 %v414, %v413
        %vm417 = vcmask 130048
        %v419 = vsel %vm417, %v410, 0
        %421 = vmatprep.subr.bf16.mxu0 0
        %422 = vmatpush1.bf16.msra.mxu0 %v415
        %423 = vmatprep.subr.bf16.mxu0 0
        %424 = vmatpush1.bf16.msra.mxu0 0
        %425 = vmatprep.subr.bf16.mxu0 0
        %426 = vmatpush1.bf16.msra.mxu0 0
        %427 = vmatprep.subr.bf16.mxu0 0
        %428 = vmatpush1.bf16.msra.mxu0 0
        %429 = vmatprep.subr.bf16.mxu0 0
        %430 = vmatpush1.bf16.msra.mxu0 0
        %431 = vmatprep.subr.bf16.mxu0 0
        %432 = vmatpush1.bf16.msra.mxu0 0
        %433 = vmatprep.subr.bf16.mxu0 0
        %434 = vmatpush1.bf16.msra.mxu0 0
        %435 = vmatprep.subr.bf16.mxu0 0
        %436 = vmatpush1.bf16.msra.mxu0 0
        %437 = vmatprep.subr.bf16.mxu0 0
        %438 = vmatpush1.bf16.msra.mxu0 0
        %439 = vmatprep.subr.bf16.mxu0 0
        %440 = vmatpush1.bf16.msra.mxu0 0
        %441 = vmatprep.subr.bf16.mxu0 0
        %442 = vmatpush1.bf16.msra.mxu0 0
        %443 = vmatprep.subr.bf16.mxu0 0
        %444 = vmatpush1.bf16.msra.mxu0 0
        %445 = vmatprep.subr.bf16.mxu0 0
        %446 = vmatpush1.bf16.msra.mxu0 0
        %447 = vmatprep.subr.bf16.mxu0 0
        %448 = vmatpush1.bf16.msra.mxu0 0
        %449 = vmatprep.subr.bf16.mxu0 0
        %450 = vmatpush1.bf16.msra.mxu0 0
        %451 = vmatprep.subr.bf16.mxu0 0
        %452 = vmatpush1.bf16.msra.mxu0 0
        %453 = vmatprep.mubr.bf16.mxu0 0
        %454 = vmatmul.mubr.bf16.gmra.mrb[0].mxu0 %v419
        %v455 = vpop.f32.mrb[0].mxu0
        %v456 = vadd.f32 %v399, %v455
        %v457 = vpop.f32.mrb[0].mxu0
        %v458 = vpop.f32.mrb[0].mxu0
        %v459 = vadd.f32 %v404, %v458
        %v460 = vpop.f32.mrb[0].mxu0
        %461 = vdwg.mxu0
        %v462 = vmax.f32 %v456, 0.0
        %v463 = vmax.f32 %v459, 0.0
        %v464 = vpack.c.bf16 %v463, %v462
        %v465 = vld [vmem:[%s2] sm:$0xf]
        %v466 = vld [vmem:[%s2 + $0x4] sm:$0xf]
        %v467 = vld [vmem:[%s2 + $0x8] sm:$0xf]
        %v468 = vld [vmem:[%s2 + $0xc] sm:$0xf]
        %470 = vset.pattern.permute.xlu0 0
        %471 = vperm.xlu0 %470, %v360
        %v472 = vpop.permute.xlu0 %471
        %475 = vset.pattern.permute.xlu0 0
        %476 = vperm.xlu0 %475, %v361
        %v477 = vpop.permute.xlu0 %476
        %480 = vset.pattern.permute.xlu0 0
        %481 = vperm.xlu0 %480, %v362
        %v482 = vpop.permute.xlu0 %481
        %485 = vset.pattern.permute.xlu0 0
        %486 = vperm.xlu0 %485, %v363
        %v487 = vpop.permute.xlu0 %486
        %v493 = vunpack.c.l.b16 %v465
        %v494 = vunpack.c.l.b16 %v466
        %v495 = vunpack.c.l.b16 %v467
        %v496 = vunpack.c.l.b16 %v468
        %v497 = vpack.c.b16 %v494, %v493
        %v498 = vpack.c.b16 %v496, %v495
        %v500 = vsel %vm417, %v497, 0
        %v503 = vsel %vm417, %v498, 0
        %505 = vmatprep.subr.bf16.mxu0 0
        %506 = vmatpush1.bf16.msra.mxu0 %v464
        %507 = vmatprep.subr.bf16.mxu0 0
        %508 = vmatpush1.bf16.msra.mxu0 0
        %509 = vmatprep.subr.bf16.mxu0 0
        %510 = vmatpush1.bf16.msra.mxu0 0
        %511 = vmatprep.subr.bf16.mxu0 0
        %512 = vmatpush1.bf16.msra.mxu0 0
        %513 = vmatprep.subr.bf16.mxu0 0
        %514 = vmatpush1.bf16.msra.mxu0 0
        %515 = vmatprep.subr.bf16.mxu0 0
        %516 = vmatpush1.bf16.msra.mxu0 0
        %517 = vmatprep.subr.bf16.mxu0 0
        %518 = vmatpush1.bf16.msra.mxu0 0
        %519 = vmatprep.subr.bf16.mxu0 0
        %520 = vmatpush1.bf16.msra.mxu0 0
        %521 = vmatprep.subr.bf16.mxu0 0
        %522 = vmatpush1.bf16.msra.mxu0 0
        %523 = vmatprep.subr.bf16.mxu0 0
        %524 = vmatpush1.bf16.msra.mxu0 0
        %525 = vmatprep.subr.bf16.mxu0 0
        %526 = vmatpush1.bf16.msra.mxu0 0
        %527 = vmatprep.subr.bf16.mxu0 0
        %528 = vmatpush1.bf16.msra.mxu0 0
        %529 = vmatprep.subr.bf16.mxu0 0
        %530 = vmatpush1.bf16.msra.mxu0 0
        %531 = vmatprep.subr.bf16.mxu0 0
        %532 = vmatpush1.bf16.msra.mxu0 0
        %533 = vmatprep.subr.bf16.mxu0 0
        %534 = vmatpush1.bf16.msra.mxu0 0
        %535 = vmatprep.subr.bf16.mxu0 0
        %536 = vmatpush1.bf16.msra.mxu0 0
        %537 = vmatprep.mubr.bf16.mxu0 0
        %538 = vmatmul.mubr.bf16.gmra.mrb[0].mxu0 %v500
        %v539 = vpop.f32.mrb[0].mxu0
        %v540 = vadd.f32 %v472, %v539
        %v541 = vpop.f32.mrb[0].mxu0
        %v542 = vpop.f32.mrb[0].mxu0
        %v543 = vadd.f32 %v477, %v542
        %v544 = vpop.f32.mrb[0].mxu0
        %545 = vmatprep.mubr.bf16.mxu0 0
        %546 = vmatmul.mubr.bf16.gmra.mrb[0].mxu0 %v503
        %v547 = vpop.f32.mrb[0].mxu0
        %v548 = vadd.f32 %v482, %v547
        %v549 = vpop.f32.mrb[0].mxu0
        %v550 = vpop.f32.mrb[0].mxu0
        %v551 = vadd.f32 %v487, %v550
        %v552 = vpop.f32.mrb[0].mxu0
        %553 = vdwg.mxu0
        %v554 = vmax.f32 %v540, 0.0
        %v555 = vmax.f32 %v543, 0.0
        %v556 = vmax.f32 %v548, 0.0
        %v557 = vmax.f32 %v551, 0.0
        %vm558 = vcmask 15360
        %v559 = vsel %vm558, %v554, -inf
        %560 = vmax.xlane.f32.xlu0 %v559
        %v561 = vpop.xlane.xlu0 %560
        %v562 = vsel %vm558, %v555, -inf
        %563 = vmax.xlane.f32.xlu0 %v562
        %v564 = vpop.xlane.xlu0 %563
        %v565 = vsel %vm558, %v556, -inf
        %566 = vmax.xlane.f32.xlu0 %v565
        %v567 = vpop.xlane.xlu0 %566
        %v568 = vsel %vm558, %v557, -inf
        %569 = vmax.xlane.f32.xlu0 %v568
        %v570 = vpop.xlane.xlu0 %569
        %vm571 = vcmask 31760
        %v572 = vsel %vm571, %v554, -inf
        %573 = vmax.xlane.f32.xlu0 %v572
        %v574 = vpop.xlane.xlu0 %573
        %v575 = vsel %vm571, %v555, -inf
        %576 = vmax.xlane.f32.xlu0 %v575
        %v577 = vpop.xlane.xlu0 %576
        %v578 = vsel %vm571, %v556, -inf
        %579 = vmax.xlane.f32.xlu0 %v578
        %v580 = vpop.xlane.xlu0 %579
        %v581 = vsel %vm571, %v557, -inf
        %582 = vmax.xlane.f32.xlu0 %v581
        %v583 = vpop.xlane.xlu0 %582
        %vm584 = vcmask 48160
        %v585 = vsel %vm584, %v554, -inf
        %586 = vmax.xlane.f32.xlu0 %v585
        %v587 = vpop.xlane.xlu0 %586
        %v588 = vsel %vm584, %v555, -inf
        %589 = vmax.xlane.f32.xlu0 %v588
        %v590 = vpop.xlane.xlu0 %589
        %v591 = vsel %vm584, %v556, -inf
        %592 = vmax.xlane.f32.xlu0 %v591
        %v593 = vpop.xlane.xlu0 %592
        %v594 = vsel %vm584, %v557, -inf
        %595 = vmax.xlane.f32.xlu0 %v594
        %v596 = vpop.xlane.xlu0 %595
        %vm597 = vcmask 64560
        %v598 = vsel %vm597, %v554, -inf
        %599 = vmax.xlane.f32.xlu0 %v598
        %v600 = vpop.xlane.xlu0 %599
        %v601 = vsel %vm597, %v555, -inf
        %602 = vmax.xlane.f32.xlu0 %v601
        %v603 = vpop.xlane.xlu0 %602
        %v604 = vsel %vm597, %v556, -inf
        %605 = vmax.xlane.f32.xlu0 %v604
        %v606 = vpop.xlane.xlu0 %605
        %v607 = vsel %vm597, %v557, -inf
        %608 = vmax.xlane.f32.xlu0 %v607
        %v609 = vpop.xlane.xlu0 %608
        %vm610 = vcmask 7168
        %v611 = vsel %vm610, %v561, %v574
        %v612 = vsel %vm610, %v564, %v577
        %v613 = vsel %vm610, %v567, %v580
        %v614 = vsel %vm610, %v570, %v583
        %v615 = vsel %vm558, %v611, %v587
        %v616 = vsel %vm558, %v612, %v590
        %v617 = vsel %vm558, %v613, %v593
        %v618 = vsel %vm558, %v614, %v596
        %vm619 = vcmask 23552
        %v620 = vsel %vm619, %v615, %v600
        %v621 = vsel %vm619, %v616, %v603
        %v622 = vsel %vm619, %v617, %v606
        %v623 = vsel %vm619, %v618, %v609
        %s624 = smul.u32 %s28, 32
        %s625 = scalar_lea.vmem [#allocation3], %s624
        %vm626 = vcmask 31744
        %627 = vst.msk [vmem:[%s625] sm:$0xff] %vm626, %v620
        %628 = vst.msk [vmem:[%s625 + $0x8] sm:$0xff] %vm626, %v621
        %629 = vst.msk [vmem:[%s625 + $0x10] sm:$0xff] %vm626, %v622
        %630 = vst.msk [vmem:[%s625 + $0x18] sm:$0xff] %vm626, %v623
        %v631 = vpack.c.bf16 %v555, %v554
        %v632 = vpack.c.bf16 %v557, %v556
        %v633 = vld [vmem:[%s3] sm:$0xf]
        %v634 = vld [vmem:[%s3 + $0x4] sm:$0xf]
        %v635 = vld [vmem:[%s3 + $0x8] sm:$0xf]
        %v636 = vld [vmem:[%s3 + $0xc] sm:$0xf]
        %v637 = vld [vmem:[%s3 + $0x10] sm:$0xf]
        %v638 = vld [vmem:[%s3 + $0x14] sm:$0xf]
        %v639 = vld [vmem:[%s3 + $0x18] sm:$0xf]
        %v640 = vld [vmem:[%s3 + $0x1c] sm:$0xf]
        %642 = vset.pattern.permute.xlu0 0
        %643 = vperm.xlu0 %642, %v364
        %v644 = vpop.permute.xlu0 %643
        %647 = vset.pattern.permute.xlu0 0
        %648 = vperm.xlu0 %647, %v365
        %v649 = vpop.permute.xlu0 %648
        %652 = vset.pattern.permute.xlu0 0
        %653 = vperm.xlu0 %652, %v366
        %v654 = vpop.permute.xlu0 %653
        %657 = vset.pattern.permute.xlu0 0
        %658 = vperm.xlu0 %657, %v367
        %v659 = vpop.permute.xlu0 %658
        %662 = vset.pattern.permute.xlu0 0
        %663 = vperm.xlu0 %662, %v368
        %v664 = vpop.permute.xlu0 %663
        %667 = vset.pattern.permute.xlu0 0
        %668 = vperm.xlu0 %667, %v369
        %v669 = vpop.permute.xlu0 %668
        %672 = vset.pattern.permute.xlu0 0
        %673 = vperm.xlu0 %672, %v370
        %v674 = vpop.permute.xlu0 %673
        %677 = vset.pattern.permute.xlu0 0
        %678 = vperm.xlu0 %677, %v371
        %v679 = vpop.permute.xlu0 %678
        %v689 = vunpack.c.l.b16 %v633
        %v690 = vunpack.c.l.b16 %v634
        %v691 = vunpack.c.l.b16 %v635
        %v692 = vunpack.c.l.b16 %v636
        %v693 = vunpack.c.l.b16 %v637
        %v694 = vunpack.c.l.b16 %v638
        %v695 = vunpack.c.l.b16 %v639
        %v696 = vunpack.c.l.b16 %v640
        %v697 = vpack.c.b16 %v690, %v689
        %v698 = vpack.c.b16 %v692, %v691
        %v699 = vpack.c.b16 %v694, %v693
        %v700 = vpack.c.b16 %v696, %v695
        %vm701 = vcmask 261120
        %v703 = vsel %vm701, %v697, 0
        %v706 = vsel %vm701, %v698, 0
        %v709 = vsel %vm701, %v699, 0
        %v712 = vsel %vm701, %v700, 0
        %714 = vmatprep.subr.bf16.mxu0 0
        %715 = vmatpush1.bf16.msra.mxu0 %v631
        %716 = vmatprep.subr.bf16.mxu0 0
        %717 = vmatpush1.bf16.msra.mxu0 %v632
        %718 = vmatprep.subr.bf16.mxu0 0
        %719 = vmatpush1.bf16.msra.mxu0 0
        %720 = vmatprep.subr.bf16.mxu0 0
        %721 = vmatpush1.bf16.msra.mxu0 0
        %722 = vmatprep.subr.bf16.mxu0 0
        %723 = vmatpush1.bf16.msra.mxu0 0
        %724 = vmatprep.subr.bf16.mxu0 0
        %725 = vmatpush1.bf16.msra.mxu0 0
        %726 = vmatprep.subr.bf16.mxu0 0
        %727 = vmatpush1.bf16.msra.mxu0 0
        %728 = vmatprep.subr.bf16.mxu0 0
        %729 = vmatpush1.bf16.msra.mxu0 0
        %730 = vmatprep.subr.bf16.mxu0 0
        %731 = vmatpush1.bf16.msra.mxu0 0
        %732 = vmatprep.subr.bf16.mxu0 0
        %733 = vmatpush1.bf16.msra.mxu0 0
        %734 = vmatprep.subr.bf16.mxu0 0
        %735 = vmatpush1.bf16.msra.mxu0 0
        %736 = vmatprep.subr.bf16.mxu0 0
        %737 = vmatpush1.bf16.msra.mxu0 0
        %738 = vmatprep.subr.bf16.mxu0 0
        %739 = vmatpush1.bf16.msra.mxu0 0
        %740 = vmatprep.subr.bf16.mxu0 0
        %741 = vmatpush1.bf16.msra.mxu0 0
        %742 = vmatprep.subr.bf16.mxu0 0
        %743 = vmatpush1.bf16.msra.mxu0 0
        %744 = vmatprep.subr.bf16.mxu0 0
        %745 = vmatpush1.bf16.msra.mxu0 0
        %746 = vmatprep.mubr.bf16.mxu0 0
        %747 = vmatmul.mubr.bf16.gmra.mrb[0].mxu0 %v703
        %v748 = vpop.f32.mrb[0].mxu0
        %v749 = vadd.f32 %v644, %v748
        %v750 = vpop.f32.mrb[0].mxu0
        %v751 = vpop.f32.mrb[0].mxu0
        %v752 = vadd.f32 %v649, %v751
        %v753 = vpop.f32.mrb[0].mxu0
        %754 = vmatprep.mubr.bf16.mxu0 0
        %755 = vmatmul.mubr.bf16.gmra.mrb[0].mxu0 %v706
        %v756 = vpop.f32.mrb[0].mxu0
        %v757 = vadd.f32 %v654, %v756
        %v758 = vpop.f32.mrb[0].mxu0
        %v759 = vpop.f32.mrb[0].mxu0
        %v760 = vadd.f32 %v659, %v759
        %v761 = vpop.f32.mrb[0].mxu0
        %762 = vmatprep.mubr.bf16.mxu0 0
        %763 = vmatmul.mubr.bf16.gmra.mrb[0].mxu0 %v709
        %v764 = vpop.f32.mrb[0].mxu0
        %v765 = vadd.f32 %v664, %v764
        %v766 = vpop.f32.mrb[0].mxu0
        %v767 = vpop.f32.mrb[0].mxu0
        %v768 = vadd.f32 %v669, %v767
        %v769 = vpop.f32.mrb[0].mxu0
        %770 = vmatprep.mubr.bf16.mxu0 0
        %771 = vmatmul.mubr.bf16.gmra.mrb[0].mxu0 %v712
        %v772 = vpop.f32.mrb[0].mxu0
        %v773 = vadd.f32 %v674, %v772
        %v774 = vpop.f32.mrb[0].mxu0
        %v775 = vpop.f32.mrb[0].mxu0
        %v776 = vadd.f32 %v679, %v775
        %v777 = vpop.f32.mrb[0].mxu0
        %778 = vdwg.mxu0
        %v779 = vmax.f32 %v749, 0.0
        %v780 = vmax.f32 %v752, 0.0
        %v781 = vmax.f32 %v757, 0.0
        %v782 = vmax.f32 %v760, 0.0
        %v783 = vmax.f32 %v765, 0.0
        %v784 = vmax.f32 %v768, 0.0
        %v785 = vmax.f32 %v773, 0.0
        %v786 = vmax.f32 %v776, 0.0
        %v787 = vld [vmem:[#allocation2] sm:$0xff]
        %v788 = vld [vmem:[#allocation2 + $0x8] sm:$0xff]
        %v789 = vld [vmem:[#allocation2 + $0x10] sm:$0xff]
        %v790 = vld [vmem:[#allocation2 + $0x18] sm:$0xff]
        %v791 = vld [vmem:[#allocation2 + $0x20] sm:$0xff]
        %v792 = vld [vmem:[#allocation2 + $0x28] sm:$0xff]
        %v793 = vld [vmem:[#allocation2 + $0x30] sm:$0xff]
        %v794 = vld [vmem:[#allocation2 + $0x38] sm:$0xff]
        %vm795 = vcmask 64512
        %v796 = vsel %vm795, %v779, -inf
        %797 = vmax.xlane.f32.xlu0 %v796
        %v798 = vpop.xlane.xlu0 %797
        %v799 = vsel %vm795, %v780, -inf
        %800 = vmax.xlane.f32.xlu0 %v799
        %v801 = vpop.xlane.xlu0 %800
        %v802 = vsel %vm795, %v781, -inf
        %803 = vmax.xlane.f32.xlu0 %v802
        %v804 = vpop.xlane.xlu0 %803
        %v805 = vsel %vm795, %v782, -inf
        %806 = vmax.xlane.f32.xlu0 %v805
        %v807 = vpop.xlane.xlu0 %806
        %v808 = vsel %vm795, %v783, -inf
        %809 = vmax.xlane.f32.xlu0 %v808
        %v810 = vpop.xlane.xlu0 %809
        %v811 = vsel %vm795, %v784, -inf
        %812 = vmax.xlane.f32.xlu0 %v811
        %v813 = vpop.xlane.xlu0 %812
        %v814 = vsel %vm795, %v785, -inf
        %815 = vmax.xlane.f32.xlu0 %v814
        %v816 = vpop.xlane.xlu0 %815
        %v817 = vsel %vm795, %v786, -inf
        %818 = vmax.xlane.f32.xlu0 %v817
        %v819 = vpop.xlane.xlu0 %818
        %v820 = vmax.f32 %v787, %v798
        %v821 = vmax.f32 %v788, %v801
        %v822 = vmax.f32 %v789, %v804
        %v823 = vmax.f32 %v790, %v807
        %v824 = vmax.f32 %v791, %v810
        %v825 = vmax.f32 %v792, %v813
        %v826 = vmax.f32 %v793, %v816
        %v827 = vmax.f32 %v794, %v819
        %828 = vst.msk [vmem:[#allocation2] sm:$0xff] %vm610, %v820
        %829 = vst.msk [vmem:[#allocation2 + $0x8] sm:$0xff] %vm610, %v821
        %830 = vst.msk [vmem:[#allocation2 + $0x10] sm:$0xff] %vm610, %v822
        %831 = vst.msk [vmem:[#allocation2 + $0x18] sm:$0xff] %vm610, %v823
        %832 = vst.msk [vmem:[#allocation2 + $0x20] sm:$0xff] %vm610, %v824
        %833 = vst.msk [vmem:[#allocation2 + $0x28] sm:$0xff] %vm610, %v825
        %834 = vst.msk [vmem:[#allocation2 + $0x30] sm:$0xff] %vm610, %v826
        %835 = vst.msk [vmem:[#allocation2 + $0x38] sm:$0xff] %vm610, %v827
        %p836 = scmp.eq.s32.totalorder %s28, 1
        // Predicated region
        $region61: #{tpu_custom_call.1} parent=55 // pred_check
          %p837 = pneg %p836
        $region62: #{tpu_custom_call.1} parent=55 // pred_check_branch
          %839 = sbr.rel (%p837) target = $region64
        $region63: #{tpu_custom_call.1} parent=55 // pred_region
          %v840 = vld [vmem:[#allocation3] sm:$0xff]
          %v841 = vld [vmem:[#allocation3 + $0x8] sm:$0xff]
          %v842 = vld [vmem:[#allocation3 + $0x10] sm:$0xff]
          %v843 = vld [vmem:[#allocation3 + $0x18] sm:$0xff]
          %s844 = scalar_lea.vmem [#allocation3], 32
          %v845 = vld [vmem:[%s844] sm:$0xff]
          %v846 = vld [vmem:[%s844 + $0x8] sm:$0xff]
          %v847 = vld [vmem:[%s844 + $0x10] sm:$0xff]
          %v848 = vld [vmem:[%s844 + $0x18] sm:$0xff]
          %853 = vrot.lane.b32.xlu0 %v845, 4
          %v854 = vpop.permute.xlu0 %853
          %855 = vrot.lane.b32.xlu0 %v846, 4
          %v856 = vpop.permute.xlu0 %855
          %857 = vrot.lane.b32.xlu0 %v847, 4
          %v858 = vpop.permute.xlu0 %857
          %859 = vrot.lane.b32.xlu0 %v848, 4
          %v860 = vpop.permute.xlu0 %859
          %v865 = vsel %vm626, %v840, %v854
          %v866 = vsel %vm626, %v841, %v856
          %v867 = vsel %vm626, %v842, %v858
          %v868 = vsel %vm626, %v843, %v860
          %v869 = vpack.c.bf16 %v866, %v865
          %v870 = vpack.c.bf16 %v868, %v867
          %v871 = vld [vmem:[#allocation2] sm:$0xff]
          %v872 = vld [vmem:[#allocation2 + $0x8] sm:$0xff]
          %v873 = vld [vmem:[#allocation2 + $0x10] sm:$0xff]
          %v874 = vld [vmem:[#allocation2 + $0x18] sm:$0xff]
          %v875 = vld [vmem:[#allocation2 + $0x20] sm:$0xff]
          %v876 = vld [vmem:[#allocation2 + $0x28] sm:$0xff]
          %v877 = vld [vmem:[#allocation2 + $0x30] sm:$0xff]
          %v878 = vld [vmem:[#allocation2 + $0x38] sm:$0xff]
          %v879 = vpack.c.bf16 %v872, %v871
          %v880 = vpack.c.bf16 %v874, %v873
          %v881 = vpack.c.bf16 %v876, %v875
          %v882 = vpack.c.bf16 %v878, %v877
          %v883 = vld [vmem:[%s4] sm:$0xf]
          %v884 = vld [vmem:[%s4 + $0x4] sm:$0xf]
          %v885 = vld [vmem:[%s4 + $0x8] sm:$0xf]
          %v886 = vld [vmem:[%s4 + $0xc] sm:$0xf]
          %v887 = vld [vmem:[%s5] sm:$0xf]
          %v888 = vld [vmem:[%s5 + $0x4] sm:$0xf]
          %v889 = vld [vmem:[%s5 + $0x8] sm:$0xf]
          %v890 = vld [vmem:[%s5 + $0xc] sm:$0xf]
          %v895 = vunpack.c.l.b16 %v887
          %v896 = vunpack.c.l.b16 %v888
          %v897 = vunpack.c.l.b16 %v889
          %v898 = vunpack.c.l.b16 %v890
          %v899 = vpack.c.b16 %v896, %v895
          %v900 = vpack.c.b16 %v898, %v897
          %vm901 = vcmask 523264
          %v903 = vsel %vm901, %v899, 0
          %v906 = vsel %vm901, %v900, 0
          %908 = vmatprep.subr.bf16.mxu0 0
          %909 = vmatpush1.bf16.msra.mxu0 %v879
          %910 = vmatprep.subr.bf16.mxu0 0
          %911 = vmatpush1.bf16.msra.mxu0 %v880
          %912 = vmatprep.subr.bf16.mxu0 0
          %913 = vmatpush1.bf16.msra.mxu0 %v881
          %914 = vmatprep.subr.bf16.mxu0 0
          %915 = vmatpush1.bf16.msra.mxu0 %v882
          %916 = vmatprep.subr.bf16.mxu0 0
          %917 = vmatpush1.bf16.msra.mxu0 0
          %918 = vmatprep.subr.bf16.mxu0 0
          %919 = vmatpush1.bf16.msra.mxu0 0
          %920 = vmatprep.subr.bf16.mxu0 0
          %921 = vmatpush1.bf16.msra.mxu0 0
          %922 = vmatprep.subr.bf16.mxu0 0
          %923 = vmatpush1.bf16.msra.mxu0 0
          %924 = vmatprep.subr.bf16.mxu0 0
          %925 = vmatpush1.bf16.msra.mxu0 0
          %926 = vmatprep.subr.bf16.mxu0 0
          %927 = vmatpush1.bf16.msra.mxu0 0
          %928 = vmatprep.subr.bf16.mxu0 0
          %929 = vmatpush1.bf16.msra.mxu0 0
          %930 = vmatprep.subr.bf16.mxu0 0
          %931 = vmatpush1.bf16.msra.mxu0 0
          %932 = vmatprep.subr.bf16.mxu0 0
          %933 = vmatpush1.bf16.msra.mxu0 0
          %934 = vmatprep.subr.bf16.mxu0 0
          %935 = vmatpush1.bf16.msra.mxu0 0
          %936 = vmatprep.subr.bf16.mxu0 0
          %937 = vmatpush1.bf16.msra.mxu0 0
          %938 = vmatprep.subr.bf16.mxu0 0
          %939 = vmatpush1.bf16.msra.mxu0 0
          %940 = vmatprep.mubr.bf16.mxu0 0
          %941 = vmatmul.mubr.bf16.gmra.mrb[0].mxu0 %v903
          %v942 = vpop.f32.mrb[0].mxu0
          %v943 = vadd.f32 0.0, %v942
          %v944 = vpop.f32.mrb[0].mxu0
          %v945 = vpop.f32.mrb[0].mxu0
          %v946 = vadd.f32 0.0, %v945
          %v947 = vpop.f32.mrb[0].mxu0
          %948 = vmatprep.mubr.bf16.mxu0 0
          %949 = vmatmul.mubr.bf16.gmra.mrb[0].mxu0 %v906
          %v950 = vpop.f32.mrb[0].mxu0
          %v951 = vadd.f32 0.0, %v950
          %v952 = vpop.f32.mrb[0].mxu0
          %v953 = vpop.f32.mrb[0].mxu0
          %v954 = vadd.f32 0.0, %v953
          %v955 = vpop.f32.mrb[0].mxu0
          %956 = vdwg.mxu0
          %958 = vset.pattern.permute.xlu0 0
          %959 = vperm.xlu0 %958, %v943
          %v960 = vpop.permute.xlu0 %959
          %963 = vset.pattern.permute.xlu0 0
          %964 = vperm.xlu0 %963, %v946
          %v965 = vpop.permute.xlu0 %964
          %968 = vset.pattern.permute.xlu0 0
          %969 = vperm.xlu0 %968, %v951
          %v970 = vpop.permute.xlu0 %969
          %973 = vset.pattern.permute.xlu0 0
          %974 = vperm.xlu0 %973, %v954
          %v975 = vpop.permute.xlu0 %974
          %v981 = vunpack.c.l.b16 %v883
          %v982 = vunpack.c.l.b16 %v884
          %v983 = vunpack.c.l.b16 %v885
          %v984 = vunpack.c.l.b16 %v886
          %v985 = vpack.c.b16 %v982, %v981
          %v986 = vpack.c.b16 %v984, %v983
          %v988 = vsel %vm701, %v985, 0
          %v991 = vsel %vm701, %v986, 0
          %993 = vmatprep.subr.bf16.mxu0 0
          %994 = vmatpush1.bf16.msra.mxu0 %v869
          %995 = vmatprep.subr.bf16.mxu0 0
          %996 = vmatpush1.bf16.msra.mxu0 %v870
          %997 = vmatprep.subr.bf16.mxu0 0
          %998 = vmatpush1.bf16.msra.mxu0 0
          %999 = vmatprep.subr.bf16.mxu0 0
          %1000 = vmatpush1.bf16.msra.mxu0 0
          %1001 = vmatprep.subr.bf16.mxu0 0
          %1002 = vmatpush1.bf16.msra.mxu0 0
          %1003 = vmatprep.subr.bf16.mxu0 0
          %1004 = vmatpush1.bf16.msra.mxu0 0
          %1005 = vmatprep.subr.bf16.mxu0 0
          %1006 = vmatpush1.bf16.msra.mxu0 0
          %1007 = vmatprep.subr.bf16.mxu0 0
          %1008 = vmatpush1.bf16.msra.mxu0 0
          %1009 = vmatprep.subr.bf16.mxu0 0
          %1010 = vmatpush1.bf16.msra.mxu0 0
          %1011 = vmatprep.subr.bf16.mxu0 0
          %1012 = vmatpush1.bf16.msra.mxu0 0
          %1013 = vmatprep.subr.bf16.mxu0 0
          %1014 = vmatpush1.bf16.msra.mxu0 0
          %1015 = vmatprep.subr.bf16.mxu0 0
          %1016 = vmatpush1.bf16.msra.mxu0 0
          %1017 = vmatprep.subr.bf16.mxu0 0
          %1018 = vmatpush1.bf16.msra.mxu0 0
          %1019 = vmatprep.subr.bf16.mxu0 0
          %1020 = vmatpush1.bf16.msra.mxu0 0
          %1021 = vmatprep.subr.bf16.mxu0 0
          %1022 = vmatpush1.bf16.msra.mxu0 0
          %1023 = vmatprep.subr.bf16.mxu0 0
          %1024 = vmatpush1.bf16.msra.mxu0 0
          %1025 = vmatprep.mubr.bf16.mxu0 0
          %1026 = vmatmul.mubr.bf16.gmra.mrb[0].mxu0 %v988
          %v1027 = vpop.f32.mrb[0].mxu0
          %v1028 = vadd.f32 %v960, %v1027
          %v1029 = vpop.f32.mrb[0].mxu0
          %v1030 = vpop.f32.mrb[0].mxu0
          %v1031 = vadd.f32 %v965, %v1030
          %v1032 = vpop.f32.mrb[0].mxu0
          %1033 = vmatprep.mubr.bf16.mxu0 0
          %1034 = vmatmul.mubr.bf16.gmra.mrb[0].mxu0 %v991
          %v1035 = vpop.f32.mrb[0].mxu0
          %v1036 = vadd.f32 %v970, %v1035
          %v1037 = vpop.f32.mrb[0].mxu0
          %v1038 = vpop.f32.mrb[0].mxu0
          %v1039 = vadd.f32 %v975, %v1038
          %v1040 = vpop.f32.mrb[0].mxu0
          %1041 = vdwg.mxu0
          %1043 = vset.pattern.permute.xlu0 0
          %1044 = vperm.xlu0 %1043, %v372
          %v1045 = vpop.permute.xlu0 %1044
          %1048 = vset.pattern.permute.xlu0 0
          %1049 = vperm.xlu0 %1048, %v373
          %v1050 = vpop.permute.xlu0 %1049
          %1053 = vset.pattern.permute.xlu0 0
          %1054 = vperm.xlu0 %1053, %v374
          %v1055 = vpop.permute.xlu0 %1054
          %1058 = vset.pattern.permute.xlu0 0
          %1059 = vperm.xlu0 %1058, %v375
          %v1060 = vpop.permute.xlu0 %1059
          %v1062 = vadd.f32 %v1028, %v1045
          %v1063 = vadd.f32 %v1031, %v1050
          %v1064 = vadd.f32 %v1036, %v1055
          %v1065 = vadd.f32 %v1039, %v1060
          %v1066 = vmax.f32 %v1062, 0.0
          %v1067 = vmax.f32 %v1063, 0.0
          %v1068 = vmax.f32 %v1064, 0.0
          %v1069 = vmax.f32 %v1065, 0.0
          %v1070 = vpack.c.bf16 %v1067, %v1066
          %v1071 = vpack.c.bf16 %v1069, %v1068
          %v1072 = vld [vmem:[%s6] sm:$0xf]
          %v1073 = vld [vmem:[%s6 + $0x4] sm:$0xf]
          %1075 = vset.pattern.permute.xlu0 0
          %1076 = vperm.xlu0 %1075, %v376
          %v1077 = vpop.permute.xlu0 %1076
          %1080 = vset.pattern.permute.xlu0 0
          %1081 = vperm.xlu0 %1080, %v377
          %v1082 = vpop.permute.xlu0 %1081
          %v1086 = vunpack.c.l.b16 %v1072
          %v1087 = vunpack.c.l.b16 %v1073
          %v1088 = vpack.c.b16 %v1087, %v1086
          %v1090 = vsel %vm701, %v1088, 0
          %1092 = vmatprep.subr.bf16.mxu0 0
          %1093 = vmatpush1.bf16.msra.mxu0 %v1070
          %1094 = vmatprep.subr.bf16.mxu0 0
          %1095 = vmatpush1.bf16.msra.mxu0 %v1071
          %1096 = vmatprep.subr.bf16.mxu0 0
          %1097 = vmatpush1.bf16.msra.mxu0 0
          %1098 = vmatprep.subr.bf16.mxu0 0
          %1099 = vmatpush1.bf16.msra.mxu0 0
          %1100 = vmatprep.subr.bf16.mxu0 0
          %1101 = vmatpush1.bf16.msra.mxu0 0
          %1102 = vmatprep.subr.bf16.mxu0 0
          %1103 = vmatpush1.bf16.msra.mxu0 0
          %1104 = vmatprep.subr.bf16.mxu0 0
          %1105 = vmatpush1.bf16.msra.mxu0 0
          %1106 = vmatprep.subr.bf16.mxu0 0
          %1107 = vmatpush1.bf16.msra.mxu0 0
          %1108 = vmatprep.subr.bf16.mxu0 0
          %1109 = vmatpush1.bf16.msra.mxu0 0
          %1110 = vmatprep.subr.bf16.mxu0 0
          %1111 = vmatpush1.bf16.msra.mxu0 0
          %1112 = vmatprep.subr.bf16.mxu0 0
          %1113 = vmatpush1.bf16.msra.mxu0 0
          %1114 = vmatprep.subr.bf16.mxu0 0
          %1115 = vmatpush1.bf16.msra.mxu0 0
          %1116 = vmatprep.subr.bf16.mxu0 0
          %1117 = vmatpush1.bf16.msra.mxu0 0
          %1118 = vmatprep.subr.bf16.mxu0 0
          %1119 = vmatpush1.bf16.msra.mxu0 0
          %1120 = vmatprep.subr.bf16.mxu0 0
          %1121 = vmatpush1.bf16.msra.mxu0 0
          %1122 = vmatprep.subr.bf16.mxu0 0
          %1123 = vmatpush1.bf16.msra.mxu0 0
          %1124 = vmatprep.mubr.bf16.mxu0 0
          %1125 = vmatmul.mubr.bf16.gmra.mrb[0].mxu0 %v1090
          %v1126 = vpop.f32.mrb[0].mxu0
          %v1127 = vadd.f32 %v1077, %v1126
          %v1128 = vpop.f32.mrb[0].mxu0
          %v1129 = vpop.f32.mrb[0].mxu0
          %v1130 = vadd.f32 %v1082, %v1129
          %v1131 = vpop.f32.mrb[0].mxu0
          %1132 = vdwg.mxu0
          %v1133 = vmax.f32 %v1127, 0.0
          %v1134 = vmax.f32 %v1130, 0.0
          %v1135 = vpack.c.bf16 %v1134, %v1133
          %v1136 = vld [vmem:[%s7] sm:$0xf]
          %1138 = vset.pattern.permute.xlu0 0
          %1139 = vperm.xlu0 %1138, %v378
          %v1140 = vpop.permute.xlu0 %1139
          %v1143 = vsel %vm417, %v1136, 0
          %1145 = vmatprep.subr.bf16.mxu0 0
          %1146 = vmatpush1.bf16.msra.mxu0 %v1135
          %1147 = vmatprep.subr.bf16.mxu0 0
          %1148 = vmatpush1.bf16.msra.mxu0 0
          %1149 = vmatprep.subr.bf16.mxu0 0
          %1150 = vmatpush1.bf16.msra.mxu0 0
          %1151 = vmatprep.subr.bf16.mxu0 0
          %1152 = vmatpush1.bf16.msra.mxu0 0
          %1153 = vmatprep.subr.bf16.mxu0 0
          %1154 = vmatpush1.bf16.msra.mxu0 0
          %1155 = vmatprep.subr.bf16.mxu0 0
          %1156 = vmatpush1.bf16.msra.mxu0 0
          %1157 = vmatprep.subr.bf16.mxu0 0
          %1158 = vmatpush1.bf16.msra.mxu0 0
          %1159 = vmatprep.subr.bf16.mxu0 0
          %1160 = vmatpush1.bf16.msra.mxu0 0
          %1161 = vmatprep.subr.bf16.mxu0 0
          %1162 = vmatpush1.bf16.msra.mxu0 0
          %1163 = vmatprep.subr.bf16.mxu0 0
          %1164 = vmatpush1.bf16.msra.mxu0 0
          %1165 = vmatprep.subr.bf16.mxu0 0
          %1166 = vmatpush1.bf16.msra.mxu0 0
          %1167 = vmatprep.subr.bf16.mxu0 0
          %1168 = vmatpush1.bf16.msra.mxu0 0
          %1169 = vmatprep.subr.bf16.mxu0 0
          %1170 = vmatpush1.bf16.msra.mxu0 0
          %1171 = vmatprep.subr.bf16.mxu0 0
          %1172 = vmatpush1.bf16.msra.mxu0 0
          %1173 = vmatprep.subr.bf16.mxu0 0
          %1174 = vmatpush1.bf16.msra.mxu0 0
          %1175 = vmatprep.subr.bf16.mxu0 0
          %1176 = vmatpush1.bf16.msra.mxu0 0
          %1177 = vmatprep.mubr.bf16.mxu0 0
          %1178 = vmatmul.mubr.bf16.gmra.mrb[0].mxu0 %v1143
          %v1179 = vpop.f32.mrb[0].mxu0
          %v1180 = vadd.f32 %v1140, %v1179
          %v1181 = vpop.f32.mrb[0].mxu0
          %v1182 = vpop.f32.mrb[0].mxu0
          %v1183 = vpop.f32.mrb[0].mxu0
          %1184 = vdwg.mxu0
          %1185 = vst.msk [vmem:[%s347] sm:$0xff] %vm795, %v1180
        $region64: #{tpu_custom_call.1} parent=55 // pred_fallthru
          _
        %s1186 = sand.u32 %s239, 1
        %s1187 = scalar_lea.sflag [#allocation5], %s1186
        %s1188 = sand.u32 %s239, 1
        %s1189 = smul.addr %s1188, 8
        %s1190 = scalar_lea.vmem [#allocation4], %s1189
        // Predicated region
        $region65: #{tpu_custom_call.1} parent=55 // pred_check
          %p1191 = pneg %p249
        $region66: #{tpu_custom_call.1} parent=55 // pred_check_branch
          %1193 = sbr.rel (%p1191) target = $region68
        $region67: #{tpu_custom_call.1} parent=55 // pred_region
          %s1195 = ssub.s32 128, 128
          %1196 = vsyncadd %s1187, %s1195
          %s1197 = smul.addr %s27, 128
          %s1198 = scalar_lea.hbm %s9, %s1197
          %s1200 = sshll.u32 %s1190, 4
          %s1201 = int_to_ptr.vmem [resolvable:$true] %s1200
          %1203 = dma.vmem_to_hbm [thread:$0]  %s1201, 128, %s1198, %s1187
        $region68: #{tpu_custom_call.1} parent=55 // pred_fallthru
          _
      $region56: #{tpu_custom_call.1} parent=5 // pred_fallthru
        _
      %p1204 = scmp.le.s32.totalorder 2, %s18
      // Predicated region
      $region69: #{tpu_custom_call.1} parent=5 // pred_check
        %p1205 = pneg %p1204
      $region70: #{tpu_custom_call.1} parent=5 // pred_check_branch
        %1207 = sbr.rel (%p1205) target = $region72
      $region71: #{tpu_custom_call.1} parent=5 // pred_region
        %s1208 = ssub.s32 %s18, 2
        // Predicated region
        $region73: #{tpu_custom_call.1} parent=71 // pred_check
          %p1209 = pneg %p255
        $region74: #{tpu_custom_call.1} parent=71 // pred_check_branch
          %1211 = sbr.rel (%p1209) target = $region76
        $region75: #{tpu_custom_call.1} parent=71 // pred_region
          %s1212 = sand.u32 %s240, 1
          %s1213 = scalar_lea.sflag [#allocation5], %s1212
          %s1214 = sand.u32 %s240, 1
          %s1215 = smul.addr %s1214, 8
          %s1216 = scalar_lea.vmem [#allocation4], %s1215
          %1217 = dma.done %s1213, 128
        $region76: #{tpu_custom_call.1} parent=71 // pred_fallthru
          _
      $region72: #{tpu_custom_call.1} parent=5 // pred_fallthru
        _
    $region6: #{tpu_custom_call.1} parent=1 // loop_footer
      %s22 = sadd.s32 1, %s18
    $region7: #{tpu_custom_call.1} parent=1 // loop_footer_branch
      %17 = sbr.rel target = $region3
    $region8: #{tpu_custom_call.1} parent=1 // loop_exit
      _
    %1218 = vsyncpa [#allocation5], 1
    %s1219 = scalar_lea.sflag [#allocation5], 1
    %1220 = vsyncpa %s1219, 1

</llo_original>
